<compile_context>
chip_gen: v7x
topology: tpu7x:2x2x1
jax: 0.10.0
libtpu: 0.0.40
codegen_flags: <defaults>
</compile_context>

<pallas_src>
import functools

import jax
import jax.numpy as jnp
from jax.experimental import pallas as pl
from jax.experimental.pallas import tpu as pltpu


# ------------------------------- helpers ----------------------------------- #

def _round_up(x, m):
    return (x + m - 1) // m * m


def _pick_row_tile(M, cap=1024, min_steps=4):
    """Row tile (sublane dim) selection.

    Targets >= min_steps grid steps (>= 2 per TensorCore on v7x megacore) so the
    input DMA prologue is pipelined away, and rounds bm to a multiple of 256 for
    large M (full MXU passes, big tiles near the HBM roofline). For small M it
    falls back to 16-aligned tiles (bf16 sublane packing).
    """
    M = max(M, 1)
    if M >= min_steps * 256:
        bm = min(cap, (M // min_steps) // 256 * 256)
    else:
        bm = _round_up(max(pl.cdiv(M, min_steps), 8), 16)
    m_pad = _round_up(M, bm)
    return bm, m_pad, m_pad // bm


# ----------------------------- Pallas kernels ------------------------------ #

def _conv_pool_kernel(x_ref, w_ref, shift_ref, o_ref):
    # x_ref:     (4, bm, K) bf16 -- im2col matrices of the four 2x2 pool taps
    # w_ref:     (K, Np)  bf16   -- BN-scale-folded conv weight (lanes -> 128)
    # shift_ref: (1, Np)  f32    -- folded bias/BN shift
    # o_ref:     (bm, Np) bf16   -- ReLU(max-pooled conv output)
    w = w_ref[...]
    acc = jnp.dot(x_ref[0], w, preferred_element_type=jnp.float32)
    for t in range(1, 4):
        acc = jnp.maximum(acc,
                          jnp.dot(x_ref[t], w, preferred_element_type=jnp.float32))
    o_ref[...] = jnp.maximum(acc + shift_ref[...], 0.0).astype(o_ref.dtype)


def _fc_kernel(x_ref, w1_ref, b1_ref, w2_ref, b2_ref, o_ref, *, n_valid):
    # fused fc1 + ReLU + fc2 + log_softmax over the real `n_valid` classes.
    h = jnp.dot(x_ref[...], w1_ref[...], preferred_element_type=jnp.float32)
    h = jnp.maximum(h + b1_ref[...], 0.0)
    logits = jnp.dot(h.astype(w2_ref.dtype), w2_ref[...],
                     preferred_element_type=jnp.float32) + b2_ref[...]
    # Mask padded class lanes out of the softmax (robust vs. -1e30 bias tricks).
    col = jax.lax.broadcasted_iota(jnp.int32, logits.shape, 1)
    masked = jnp.where(col < n_valid, logits, -1e30)
    m = jnp.max(masked, axis=-1, keepdims=True)
    lse = m + jnp.log(jnp.sum(jnp.exp(masked - m), axis=-1, keepdims=True))
    o_ref[...] = logits - lse


# ----------------------------- layer wrappers ------------------------------ #

def _conv_bn_relu_pool(x_nhwc, w, b, gamma, beta, mean, var, eps=1e-5):
    """VALID conv (stride 1) + inference BN + ReLU + 2x2/2 max-pool, fused."""
    Cout, Cin, KH, KW = w.shape
    x_nhwc = x_nhwc.astype(jnp.bfloat16)          # cast BEFORE building im2col
    B, H, W, _ = x_nhwc.shape
    OH, OW = H - KH + 1, W - KW + 1
    PH, PW = OH // 2, OW // 2
    K = KH * KW * Cin                             # contraction dim, unpadded
    Np = _round_up(Cout, 128)

    # weight / BN prep (tiny; BN scale folded into the weight columns host-side)
    s = gamma / jnp.sqrt(var + eps)
    w2d = jnp.transpose(w, (2, 3, 1, 0)).reshape(K, Cout) * s[None, :]
    w2d = jnp.pad(w2d, ((0, 0), (0, Np - Cout))).astype(jnp.bfloat16)
    shift = b * s + beta - mean * s
    shift = jnp.pad(shift, (0, Np - Cout)).reshape(1, Np).astype(jnp.float32)

    # im2col, one matrix per 2x2 pool-window tap; column order (kh, kw, cin)
    # matches the permuted weight -> no transpose of the big activation.
    taps = []
    for i in range(2):
        for j in range(2):
            cols = []
            for kh in range(KH):
                for kw in range(KW):
                    cols.append(x_nhwc[:, i + kh:i + kh + 2 * PH:2,
                                       j + kw:j + kw + 2 * PW:2, :])
            taps.append(jnp.concatenate(cols, axis=-1).reshape(B * PH * PW, K))
    x4 = jnp.stack(taps, axis=0)                  # (4, M, K) bf16

    M = B * PH * PW
    bm, m_pad, grid = _pick_row_tile(M, cap=1024)
    x4 = jnp.pad(x4, ((0, 0), (0, m_pad - M), (0, 0)))   # rows only, K untouched

    out = pl.pallas_call(
        _conv_pool_kernel,
        out_shape=jax.ShapeDtypeStruct((m_pad, Np), jnp.bfloat16),
        grid=(grid,),
        in_specs=[
            pl.BlockSpec((4, bm, K), lambda i: (0, i, 0)),
            # constant block index -> fetched once, stays VMEM-resident
            pl.BlockSpec((K, Np), lambda i: (0, 0)),
            pl.BlockSpec((1, Np), lambda i: (0, 0)),
        ],
        out_specs=pl.BlockSpec((bm, Np), lambda i: (i, 0)),
        compiler_params=pltpu.CompilerParams(dimension_semantics=("parallel",)),
    )(x4, w2d, shift)
    return out[:M, :Cout].reshape(B, PH, PW, Cout)


def _fc1_fc2_logsoftmax(x, w1, b1, w2, b2):
    """log_softmax(relu(x @ w1.T + b1) @ w2.T + b2) in a single fused kernel."""
    M, K = x.shape                                # K = 160, left unpadded
    Hdim, N = w1.shape[0], w2.shape[0]
    Hp, Np = _round_up(Hdim, 128), _round_up(N, 128)

    w1p = jnp.pad(w1.T, ((0, 0), (0, Hp - Hdim))).astype(jnp.bfloat16)
    b1p = jnp.pad(b1, (0, Hp - Hdim)).reshape(1, Hp).astype(jnp.float32)
    w2p = jnp.pad(w2.T, ((0, Hp - Hdim), (0, Np - N))).astype(jnp.bfloat16)
    b2p = jnp.pad(b2, (0, Np - N)).reshape(1, Np).astype(jnp.float32)

    bm, m_pad, grid = _pick_row_tile(M, cap=512)
    xp = jnp.pad(x.astype(jnp.bfloat16), ((0, m_pad - M), (0, 0)))

    out = pl.pallas_call(
        functools.partial(_fc_kernel, n_valid=N),
        out_shape=jax.ShapeDtypeStruct((m_pad, Np), jnp.float32),
        grid=(grid,),
        in_specs=[
            pl.BlockSpec((bm, K), lambda i: (i, 0)),
            pl.BlockSpec((K, Hp), lambda i: (0, 0)),
            pl.BlockSpec((1, Hp), lambda i: (0, 0)),
            pl.BlockSpec((Hp, Np), lambda i: (0, 0)),
            pl.BlockSpec((1, Np), lambda i: (0, 0)),
        ],
        out_specs=pl.BlockSpec((bm, Np), lambda i: (i, 0)),
        compiler_params=pltpu.CompilerParams(dimension_semantics=("parallel",)),
    )(xp, w1p, b1p, w2p, b2p)
    return out[:M, :N]


# ------------------------------- model glue -------------------------------- #

def init_params(key):
    ks = jax.random.split(key, 8)

    def u(k, shape, fan_in):
        bound = 1.0 / jnp.sqrt(float(fan_in))
        return jax.random.uniform(k, shape, jnp.float32, -bound, bound)

    p = {
        "conv1_w": u(ks[0], (5, 1, 5, 5), 1 * 5 * 5),
        "conv1_b": u(ks[1], (5,), 1 * 5 * 5),
        "conv2_w": u(ks[2], (10, 5, 5, 5), 5 * 5 * 5),
        "conv2_b": u(ks[3], (10,), 5 * 5 * 5),
        "fc1_w": u(ks[4], (100, 160), 160),
        "fc1_b": u(ks[5], (100,), 160),
        "fc2_w": u(ks[6], (10, 100), 100),
        "fc2_b": u(ks[7], (10,), 100),
    }
    for i, c in ((1, 5), (2, 10)):          # BatchNorm2d default init
        p[f"bn{i}_gamma"] = jnp.ones((c,), jnp.float32)
        p[f"bn{i}_beta"] = jnp.zeros((c,), jnp.float32)
        p[f"bn{i}_mean"] = jnp.zeros((c,), jnp.float32)
        p[f"bn{i}_var"] = jnp.ones((c,), jnp.float32)
    return p


def forward(params, x_nchw):
    x = jnp.transpose(x_nchw, (0, 2, 3, 1))                        # NCHW -> NHWC
    x = _conv_bn_relu_pool(x, params["conv1_w"], params["conv1_b"],
                           params["bn1_gamma"], params["bn1_beta"],
                           params["bn1_mean"], params["bn1_var"])  # (B,12,12,5)
    x = _conv_bn_relu_pool(x, params["conv2_w"], params["conv2_b"],
                           params["bn2_gamma"], params["bn2_beta"],
                           params["bn2_mean"], params["bn2_var"])  # (B,4,4,10)
    B = x.shape[0]
    # match torch's x.view(-1, 4*4*10) on an NCHW tensor: flatten as (C, H, W)
    x = jnp.transpose(x, (0, 3, 1, 2)).reshape(B, 4 * 4 * 10)      # (B,160)
    return _fc1_fc2_logsoftmax(x, params["fc1_w"], params["fc1_b"],
                               params["fc2_w"], params["fc2_b"])   # (B,10)


# plain-JAX reference with the same bf16 operand quantization (for validation)
def _reference_forward(params, x_nchw, eps=1e-5):
    def conv_bn_relu_pool(x, w, b, g, beta, mean, var):
        s = g / jnp.sqrt(var + eps)
        wf = (w * s[:, None, None, None]).astype(jnp.bfloat16)
        shift = (b * s + beta - mean * s).astype(jnp.float32)
        y = jax.lax.conv_general_dilated(
            x.astype(jnp.bfloat16), wf, window_strides=(1, 1), padding="VALID",
            dimension_numbers=("NCHW", "OIHW", "NCHW"),
            preferred_element_type=jnp.float32)
        y = jnp.maximum(y + shift[None, :, None, None], 0.0)
        return jax.lax.reduce_window(y, -jnp.inf, jax.lax.max,
                                     (1, 1, 2, 2), (1, 1, 2, 2), "VALID")

    x = conv_bn_relu_pool(x_nchw, params["conv1_w"], params["conv1_b"],
                          params["bn1_gamma"], params["bn1_beta"],
                          params["bn1_mean"], params["bn1_var"])
    x = conv_bn_relu_pool(x, params["conv2_w"], params["conv2_b"],
                          params["bn2_gamma"], params["bn2_beta"],
                          params["bn2_mean"], params["bn2_var"])
    B = x.shape[0]
    x = x.reshape(B, -1)
    h = jnp.maximum(
        jnp.dot(x.astype(jnp.bfloat16), params["fc1_w"].T.astype(jnp.bfloat16),
                preferred_element_type=jnp.float32) + params["fc1_b"], 0.0)
    logits = jnp.dot(h.astype(jnp.bfloat16),
                     params["fc2_w"].T.astype(jnp.bfloat16),
                     preferred_element_type=jnp.float32) + params["fc2_b"]
    return jax.nn.log_softmax(logits, axis=-1)


if __name__ == "__main__":
    key = jax.random.PRNGKey(0)
    k_x, k_p = jax.random.split(key)
    x = jax.random.normal(k_x, (2, 1, 28, 28), jnp.float32)        # NCHW like torch
    params = init_params(k_p)

    out = jax.block_until_ready(jax.jit(forward)(params, x))
    assert out.shape == (2, 10), out.shape
    assert bool(jnp.all(jnp.isfinite(out)))
    # log_softmax sanity: rows of exp(out) must sum to 1
    assert jnp.allclose(jnp.sum(jnp.exp(out), axis=1), 1.0, atol=1e-4)
    # parity with a plain-JAX reference using the same bf16 quantization
    ref = jax.block_until_ready(jax.jit(_reference_forward)(params, x))
    assert jnp.allclose(out, ref, atol=1e-2), float(jnp.max(jnp.abs(out - ref)))
    print("KERNEL_OK")
</pallas_src>

<mosaic_0001>
module attributes {stable_mosaic.version = 11 : i64} {
  func.func @_conv_pool_kernel(%arg0: i32, %arg1: memref<4x80x25xbf16, #tpu.memory_space<vmem>>, %arg2: memref<25x128xbf16, #tpu.memory_space<vmem>>, %arg3: memref<1x128xf32, #tpu.memory_space<vmem>>, %arg4: memref<80x128xbf16, #tpu.memory_space<vmem>>) attributes {dimension_semantics = [#tpu.dimension_semantics<parallel>], iteration_bounds = array<i64: 4>, scalar_prefetch = 0 : i64, scratch_operands = 0 : i64, tpu.core_type = #tpu.core_type<tc>, window_params = [{transform_indices = @transform_0, window_bounds = array<i64: 4, 80, 25>}, {pipeline_mode = #tpu.pipeline_mode<synchronous>, transform_indices = @transform_1, window_bounds = array<i64: 25, 128>}, {pipeline_mode = #tpu.pipeline_mode<synchronous>, transform_indices = @transform_2, window_bounds = array<i64: 1, 128>}, {transform_indices = @transform_3, window_bounds = array<i64: 80, 128>}]} {
    %c0 = arith.constant 0 : index
    %c0_0 = arith.constant 0 : index
    %0 = vector.load %arg2[%c0, %c0_0] : memref<25x128xbf16, #tpu.memory_space<vmem>>, vector<25x128xbf16>
    %c0_1 = arith.constant 0 : index
    %c0_2 = arith.constant 0 : index
    %c0_3 = arith.constant 0 : index
    %1 = vector.load %arg1[%c0_1, %c0_2, %c0_3] : memref<4x80x25xbf16, #tpu.memory_space<vmem>>, vector<1x80x25xbf16>
    %2 = vector.shape_cast %1 : vector<1x80x25xbf16> to vector<80x25xbf16>
    %cst = arith.constant dense<0.000000e+00> : vector<80x128xf32>
    %3 = tpu.matmul %2, %0, %cst {dimension_numbers = #tpu.dot_dimension_numbers<[1], [0], [0], [1], [0, 0, 1, 1], [], []>} : vector<80x25xbf16>, vector<25x128xbf16>, vector<80x128xf32> -> vector<80x128xf32>
    %c1 = arith.constant 1 : index
    %c0_4 = arith.constant 0 : index
    %c0_5 = arith.constant 0 : index
    %4 = vector.load %arg1[%c1, %c0_4, %c0_5] : memref<4x80x25xbf16, #tpu.memory_space<vmem>>, vector<1x80x25xbf16>
    %5 = vector.shape_cast %4 : vector<1x80x25xbf16> to vector<80x25xbf16>
    %cst_6 = arith.constant dense<0.000000e+00> : vector<80x128xf32>
    %6 = tpu.matmul %5, %0, %cst_6 {dimension_numbers = #tpu.dot_dimension_numbers<[1], [0], [0], [1], [0, 0, 1, 1], [], []>} : vector<80x25xbf16>, vector<25x128xbf16>, vector<80x128xf32> -> vector<80x128xf32>
    %7 = arith.maximumf %3, %6 : vector<80x128xf32>
    %c2 = arith.constant 2 : index
    %c0_7 = arith.constant 0 : index
    %c0_8 = arith.constant 0 : index
    %8 = vector.load %arg1[%c2, %c0_7, %c0_8] : memref<4x80x25xbf16, #tpu.memory_space<vmem>>, vector<1x80x25xbf16>
    %9 = vector.shape_cast %8 : vector<1x80x25xbf16> to vector<80x25xbf16>
    %cst_9 = arith.constant dense<0.000000e+00> : vector<80x128xf32>
    %10 = tpu.matmul %9, %0, %cst_9 {dimension_numbers = #tpu.dot_dimension_numbers<[1], [0], [0], [1], [0, 0, 1, 1], [], []>} : vector<80x25xbf16>, vector<25x128xbf16>, vector<80x128xf32> -> vector<80x128xf32>
    %11 = arith.maximumf %7, %10 : vector<80x128xf32>
    %c3 = arith.constant 3 : index
    %c0_10 = arith.constant 0 : index
    %c0_11 = arith.constant 0 : index
    %12 = vector.load %arg1[%c3, %c0_10, %c0_11] : memref<4x80x25xbf16, #tpu.memory_space<vmem>>, vector<1x80x25xbf16>
    %13 = vector.shape_cast %12 : vector<1x80x25xbf16> to vector<80x25xbf16>
    %cst_12 = arith.constant dense<0.000000e+00> : vector<80x128xf32>
    %14 = tpu.matmul %13, %0, %cst_12 {dimension_numbers = #tpu.dot_dimension_numbers<[1], [0], [0], [1], [0, 0, 1, 1], [], []>} : vector<80x25xbf16>, vector<25x128xbf16>, vector<80x128xf32> -> vector<80x128xf32>
    %15 = arith.maximumf %11, %14 : vector<80x128xf32>
    %c0_13 = arith.constant 0 : index
    %c0_14 = arith.constant 0 : index
    %16 = vector.load %arg3[%c0_13, %c0_14] : memref<1x128xf32, #tpu.memory_space<vmem>>, vector<1x128xf32>
    %17 = vector.broadcast %16 : vector<1x128xf32> to vector<80x128xf32>
    %18 = arith.addf %15, %17 : vector<80x128xf32>
    %cst_15 = arith.constant 0.000000e+00 : f32
    %19 = vector.broadcast %cst_15 : f32 to vector<80x128xf32>
    %20 = arith.maximumf %18, %19 : vector<80x128xf32>
    %21 = arith.truncf %20 : vector<80x128xf32> to vector<80x128xbf16>
    %c0_16 = arith.constant 0 : index
    %c0_17 = arith.constant 0 : index
    %22 = vector.load %arg4[%c0_16, %c0_17] : memref<80x128xbf16, #tpu.memory_space<vmem>>, vector<80x128xbf16>
    tpu.vector_store %arg4[%c0_16, %c0_17], %21 {strides = array<i32>} : memref<80x128xbf16, #tpu.memory_space<vmem>>, vector<80x128xbf16>,
    return
  }
  func.func @transform_0(%arg0: i32) -> (i32, i32, i32) {
    %c0_i32 = arith.constant 0 : i32
    %c0_i32_0 = arith.constant 0 : i32
    %c0_i32_1 = arith.constant 0 : i32
    return %c0_i32, %arg0, %c0_i32_0 : i32, i32, i32
  }
  func.func @transform_1(%arg0: i32) -> (i32, i32) {
    %c0_i32 = arith.constant 0 : i32
    %c0_i32_0 = arith.constant 0 : i32
    %c0_i32_1 = arith.constant 0 : i32
    return %c0_i32, %c0_i32_0 : i32, i32
  }
  func.func @transform_2(%arg0: i32) -> (i32, i32) {
    %c0_i32 = arith.constant 0 : i32
    %c0_i32_0 = arith.constant 0 : i32
    %c0_i32_1 = arith.constant 0 : i32
    return %c0_i32, %c0_i32_0 : i32, i32
  }
  func.func @transform_3(%arg0: i32) -> (i32, i32) {
    %c0_i32 = arith.constant 0 : i32
    %c0_i32_0 = arith.constant 0 : i32
    return %arg0, %c0_i32 : i32, i32
  }
}

module attributes {stable_mosaic.version = 11 : i64} {
  func.func @_conv_pool_kernel(%arg0: i32, %arg1: memref<4x16x125xbf16, #tpu.memory_space<vmem>>, %arg2: memref<125x128xbf16, #tpu.memory_space<vmem>>, %arg3: memref<1x128xf32, #tpu.memory_space<vmem>>, %arg4: memref<16x128xbf16, #tpu.memory_space<vmem>>) attributes {dimension_semantics = [#tpu.dimension_semantics<parallel>], iteration_bounds = array<i64: 2>, scalar_prefetch = 0 : i64, scratch_operands = 0 : i64, tpu.core_type = #tpu.core_type<tc>, window_params = [{transform_indices = @transform_0, window_bounds = array<i64: 4, 16, 125>}, {pipeline_mode = #tpu.pipeline_mode<synchronous>, transform_indices = @transform_1, window_bounds = array<i64: 125, 128>}, {pipeline_mode = #tpu.pipeline_mode<synchronous>, transform_indices = @transform_2, window_bounds = array<i64: 1, 128>}, {transform_indices = @transform_3, window_bounds = array<i64: 16, 128>}]} {
    %c0 = arith.constant 0 : index
    %c0_0 = arith.constant 0 : index
    %0 = vector.load %arg2[%c0, %c0_0] : memref<125x128xbf16, #tpu.memory_space<vmem>>, vector<125x128xbf16>
    %c0_1 = arith.constant 0 : index
    %c0_2 = arith.constant 0 : index
    %c0_3 = arith.constant 0 : index
    %1 = vector.load %arg1[%c0_1, %c0_2, %c0_3] : memref<4x16x125xbf16, #tpu.memory_space<vmem>>, vector<1x16x125xbf16>
    %2 = vector.shape_cast %1 : vector<1x16x125xbf16> to vector<16x125xbf16>
    %cst = arith.constant dense<0.000000e+00> : vector<16x128xf32>
    %3 = tpu.matmul %2, %0, %cst {dimension_numbers = #tpu.dot_dimension_numbers<[1], [0], [0], [1], [0, 0, 1, 1], [], []>} : vector<16x125xbf16>, vector<125x128xbf16>, vector<16x128xf32> -> vector<16x128xf32>
    %c1 = arith.constant 1 : index
    %c0_4 = arith.constant 0 : index
    %c0_5 = arith.constant 0 : index
    %4 = vector.load %arg1[%c1, %c0_4, %c0_5] : memref<4x16x125xbf16, #tpu.memory_space<vmem>>, vector<1x16x125xbf16>
    %5 = vector.shape_cast %4 : vector<1x16x125xbf16> to vector<16x125xbf16>
    %cst_6 = arith.constant dense<0.000000e+00> : vector<16x128xf32>
    %6 = tpu.matmul %5, %0, %cst_6 {dimension_numbers = #tpu.dot_dimension_numbers<[1], [0], [0], [1], [0, 0, 1, 1], [], []>} : vector<16x125xbf16>, vector<125x128xbf16>, vector<16x128xf32> -> vector<16x128xf32>
    %7 = arith.maximumf %3, %6 : vector<16x128xf32>
    %c2 = arith.constant 2 : index
    %c0_7 = arith.constant 0 : index
    %c0_8 = arith.constant 0 : index
    %8 = vector.load %arg1[%c2, %c0_7, %c0_8] : memref<4x16x125xbf16, #tpu.memory_space<vmem>>, vector<1x16x125xbf16>
    %9 = vector.shape_cast %8 : vector<1x16x125xbf16> to vector<16x125xbf16>
    %cst_9 = arith.constant dense<0.000000e+00> : vector<16x128xf32>
    %10 = tpu.matmul %9, %0, %cst_9 {dimension_numbers = #tpu.dot_dimension_numbers<[1], [0], [0], [1], [0, 0, 1, 1], [], []>} : vector<16x125xbf16>, vector<125x128xbf16>, vector<16x128xf32> -> vector<16x128xf32>
    %11 = arith.maximumf %7, %10 : vector<16x128xf32>
    %c3 = arith.constant 3 : index
    %c0_10 = arith.constant 0 : index
    %c0_11 = arith.constant 0 : index
    %12 = vector.load %arg1[%c3, %c0_10, %c0_11] : memref<4x16x125xbf16, #tpu.memory_space<vmem>>, vector<1x16x125xbf16>
    %13 = vector.shape_cast %12 : vector<1x16x125xbf16> to vector<16x125xbf16>
    %cst_12 = arith.constant dense<0.000000e+00> : vector<16x128xf32>
    %14 = tpu.matmul %13, %0, %cst_12 {dimension_numbers = #tpu.dot_dimension_numbers<[1], [0], [0], [1], [0, 0, 1, 1], [], []>} : vector<16x125xbf16>, vector<125x128xbf16>, vector<16x128xf32> -> vector<16x128xf32>
    %15 = arith.maximumf %11, %14 : vector<16x128xf32>
    %c0_13 = arith.constant 0 : index
    %c0_14 = arith.constant 0 : index
    %16 = vector.load %arg3[%c0_13, %c0_14] : memref<1x128xf32, #tpu.memory_space<vmem>>, vector<1x128xf32>
    %17 = vector.broadcast %16 : vector<1x128xf32> to vector<16x128xf32>
    %18 = arith.addf %15, %17 : vector<16x128xf32>
    %cst_15 = arith.constant 0.000000e+00 : f32
    %19 = vector.broadcast %cst_15 : f32 to vector<16x128xf32>
    %20 = arith.maximumf %18, %19 : vector<16x128xf32>
    %21 = arith.truncf %20 : vector<16x128xf32> to vector<16x128xbf16>
    %c0_16 = arith.constant 0 : index
    %c0_17 = arith.constant 0 : index
    %22 = vector.load %arg4[%c0_16, %c0_17] : memref<16x128xbf16, #tpu.memory_space<vmem>>, vector<16x128xbf16>
    tpu.vector_store %arg4[%c0_16, %c0_17], %21 {strides = array<i32>} : memref<16x128xbf16, #tpu.memory_space<vmem>>, vector<16x128xbf16>,
    return
  }
  func.func @transform_0(%arg0: i32) -> (i32, i32, i32) {
    %c0_i32 = arith.constant 0 : i32
    %c0_i32_0 = arith.constant 0 : i32
    %c0_i32_1 = arith.constant 0 : i32
    return %c0_i32, %arg0, %c0_i32_0 : i32, i32, i32
  }
  func.func @transform_1(%arg0: i32) -> (i32, i32) {
    %c0_i32 = arith.constant 0 : i32
    %c0_i32_0 = arith.constant 0 : i32
    %c0_i32_1 = arith.constant 0 : i32
    return %c0_i32, %c0_i32_0 : i32, i32
  }
  func.func @transform_2(%arg0: i32) -> (i32, i32) {
    %c0_i32 = arith.constant 0 : i32
    %c0_i32_0 = arith.constant 0 : i32
    %c0_i32_1 = arith.constant 0 : i32
    return %c0_i32, %c0_i32_0 : i32, i32
  }
  func.func @transform_3(%arg0: i32) -> (i32, i32) {
    %c0_i32 = arith.constant 0 : i32
    %c0_i32_0 = arith.constant 0 : i32
    return %arg0, %c0_i32 : i32, i32
  }
}

module attributes {stable_mosaic.version = 11 : i64} {
  func.func @_fc_kernel(%arg0: i32, %arg1: memref<16x160xbf16, #tpu.memory_space<vmem>>, %arg2: memref<160x128xbf16, #tpu.memory_space<vmem>>, %arg3: memref<1x128xf32, #tpu.memory_space<vmem>>, %arg4: memref<128x128xbf16, #tpu.memory_space<vmem>>, %arg5: memref<1x128xf32, #tpu.memory_space<vmem>>, %arg6: memref<16x128xf32, #tpu.memory_space<vmem>>) attributes {dimension_semantics = [#tpu.dimension_semantics<parallel>], iteration_bounds = array<i64: 1>, scalar_prefetch = 0 : i64, scratch_operands = 0 : i64, tpu.core_type = #tpu.core_type<tc>, window_params = [{transform_indices = @transform_0, window_bounds = array<i64: 16, 160>}, {pipeline_mode = #tpu.pipeline_mode<synchronous>, transform_indices = @transform_1, window_bounds = array<i64: 160, 128>}, {pipeline_mode = #tpu.pipeline_mode<synchronous>, transform_indices = @transform_2, window_bounds = array<i64: 1, 128>}, {pipeline_mode = #tpu.pipeline_mode<synchronous>, transform_indices = @transform_3, window_bounds = array<i64: 128, 128>}, {pipeline_mode = #tpu.pipeline_mode<synchronous>, transform_indices = @transform_4, window_bounds = array<i64: 1, 128>}, {transform_indices = @transform_5, window_bounds = array<i64: 16, 128>}]} {
    %c0 = arith.constant 0 : index
    %c0_0 = arith.constant 0 : index
    %0 = vector.load %arg1[%c0, %c0_0] : memref<16x160xbf16, #tpu.memory_space<vmem>>, vector<16x160xbf16>
    %c0_1 = arith.constant 0 : index
    %c0_2 = arith.constant 0 : index
    %1 = vector.load %arg2[%c0_1, %c0_2] : memref<160x128xbf16, #tpu.memory_space<vmem>>, vector<160x128xbf16>
    %cst = arith.constant dense<0.000000e+00> : vector<16x128xf32>
    %2 = tpu.matmul %0, %1, %cst {dimension_numbers = #tpu.dot_dimension_numbers<[1], [0], [0], [1], [0, 0, 1, 1], [], []>} : vector<16x160xbf16>, vector<160x128xbf16>, vector<16x128xf32> -> vector<16x128xf32>
    %c0_3 = arith.constant 0 : index
    %c0_4 = arith.constant 0 : index
    %3 = vector.load %arg3[%c0_3, %c0_4] : memref<1x128xf32, #tpu.memory_space<vmem>>, vector<1x128xf32>
    %4 = vector.broadcast %3 : vector<1x128xf32> to vector<16x128xf32>
    %5 = arith.addf %2, %4 : vector<16x128xf32>
    %cst_5 = arith.constant 0.000000e+00 : f32
    %6 = vector.broadcast %cst_5 : f32 to vector<16x128xf32>
    %7 = arith.maximumf %5, %6 : vector<16x128xf32>
    %8 = arith.truncf %7 : vector<16x128xf32> to vector<16x128xbf16>
    %c0_6 = arith.constant 0 : index
    %c0_7 = arith.constant 0 : index
    %9 = vector.load %arg4[%c0_6, %c0_7] : memref<128x128xbf16, #tpu.memory_space<vmem>>, vector<128x128xbf16>
    %cst_8 = arith.constant dense<0.000000e+00> : vector<16x128xf32>
    %10 = tpu.matmul %8, %9, %cst_8 {dimension_numbers = #tpu.dot_dimension_numbers<[1], [0], [0], [1], [0, 0, 1, 1], [], []>} : vector<16x128xbf16>, vector<128x128xbf16>, vector<16x128xf32> -> vector<16x128xf32>
    %c0_9 = arith.constant 0 : index
    %c0_10 = arith.constant 0 : index
    %11 = vector.load %arg5[%c0_9, %c0_10] : memref<1x128xf32, #tpu.memory_space<vmem>>, vector<1x128xf32>
    %12 = vector.broadcast %11 : vector<1x128xf32> to vector<16x128xf32>
    %13 = arith.addf %10, %12 : vector<16x128xf32>
    %14 = tpu.iota {dimensions = array<i32: 1>} : vector<16x128xi32>
    %c10_i32 = arith.constant 10 : i32
    %15 = vector.broadcast %c10_i32 : i32 to vector<16x128xi32>
    %16 = arith.cmpi slt, %14, %15 : vector<16x128xi32>
    %cst_11 = arith.constant -1.000000e+30 : f32
    %17 = vector.broadcast %cst_11 : f32 to vector<16x128xf32>
    %18 = arith.select %16, %13, %17 : vector<16x128xi1>, vector<16x128xf32>
    %cst_12 = arith.constant dense<0xFF800000> : vector<16xf32>
    %19 = vector.multi_reduction <maximumf>, %18, %cst_12 [1] : vector<16x128xf32> to vector<16xf32>
    %20 = vector.shape_cast %19 : vector<16xf32> to vector<16x1xf32>
    %21 = vector.broadcast %20 : vector<16x1xf32> to vector<16x128xf32>
    %22 = arith.subf %18, %21 : vector<16x128xf32>
    %23 = math.exp %22 : vector<16x128xf32>
    %cst_13 = arith.constant dense<0.000000e+00> : vector<16xf32>
    %24 = vector.multi_reduction <add>, %23, %cst_13 [1] : vector<16x128xf32> to vector<16xf32>
    %25 = vector.shape_cast %24 : vector<16xf32> to vector<16x1xf32>
    %26 = math.log %25 : vector<16x1xf32>
    %27 = arith.addf %20, %26 : vector<16x1xf32>
    %28 = vector.broadcast %27 : vector<16x1xf32> to vector<16x128xf32>
    %29 = arith.subf %13, %28 : vector<16x128xf32>
    %c0_14 = arith.constant 0 : index
    %c0_15 = arith.constant 0 : index
    %30 = vector.load %arg6[%c0_14, %c0_15] : memref<16x128xf32, #tpu.memory_space<vmem>>, vector<16x128xf32>
    tpu.vector_store %arg6[%c0_14, %c0_15], %29 {strides = array<i32>} : memref<16x128xf32, #tpu.memory_space<vmem>>, vector<16x128xf32>,
    return
  }
  func.func @transform_0(%arg0: i32) -> (i32, i32) {
    %c0_i32 = arith.constant 0 : i32
    %c0_i32_0 = arith.constant 0 : i32
    return %arg0, %c0_i32 : i32, i32
  }
  func.func @transform_1(%arg0: i32) -> (i32, i32) {
    %c0_i32 = arith.constant 0 : i32
    %c0_i32_0 = arith.constant 0 : i32
    %c0_i32_1 = arith.constant 0 : i32
    return %c0_i32, %c0_i32_0 : i32, i32
  }
  func.func @transform_2(%arg0: i32) -> (i32, i32) {
    %c0_i32 = arith.constant 0 : i32
    %c0_i32_0 = arith.constant 0 : i32
    %c0_i32_1 = arith.constant 0 : i32
    return %c0_i32, %c0_i32_0 : i32, i32
  }
  func.func @transform_3(%arg0: i32) -> (i32, i32) {
    %c0_i32 = arith.constant 0 : i32
    %c0_i32_0 = arith.constant 0 : i32
    %c0_i32_1 = arith.constant 0 : i32
    return %c0_i32, %c0_i32_0 : i32, i32
  }
  func.func @transform_4(%arg0: i32) -> (i32, i32) {
    %c0_i32 = arith.constant 0 : i32
    %c0_i32_0 = arith.constant 0 : i32
    %c0_i32_1 = arith.constant 0 : i32
    return %c0_i32, %c0_i32_0 : i32, i32
  }
  func.func @transform_5(%arg0: i32) -> (i32, i32) {
    %c0_i32 = arith.constant 0 : i32
    %c0_i32_0 = arith.constant 0 : i32
    return %arg0, %c0_i32 : i32, i32
  }
}

</mosaic_0001>

<llo_original>
// kernel: forward.3
$region0: #{forward.3}
  #allocation0 [shape = 'u32[]', space=smem, size = 0x4, offset = 0x4, fixed_abs, tag = 'smem constant byte address 0x4 - core index']
  #allocation1 [shape = 'u32[144,128]{1,0:T(1,128)}', space=vmem, size = 0x12000, scoped, tag = 'internal scratch']
  %s0 = inlined_call_operand.vmem [shape: bf16[4,320,25], index: 0, kind: input, shape index: {}]
  %s1 = inlined_call_operand.vmem [shape: bf16[25,128], index: 1, kind: input, shape index: {}]
  %s2 = inlined_call_operand.vmem [shape: f32[1,128], index: 2, kind: input, shape index: {}]
  %s3 = inlined_call_operand.vmem [shape: bf16[320,128], index: 3, kind: output, shape index: {}]
  %s4 = sld [smem:[#allocation0]]
  $region86: #{forward.3} parent=0
    _
  %s6 = ssub.s32 1, %s4
  %s7 = scalar_select 0, %s6, %s4
  $region1: #{forward.3} parent=0
    #allocation2 [shape = 'u8[163840]{0}', space=vmem, size = 0x28000, scoped, tag = 'input window, operand 0']
    loop: start=0, step=1, limit=6
    $region2: #{forward.3} parent=1 // loop_pre_header
      _
    $region3: #{forward.3} parent=1 // loop_header
      %s9 = sphi 0, %s13
      %p10 = scmp.ge.s32.totalorder %s9, 6
      %s19 = sphi 0, %s21
      %s22 = sphi 0, %s19
      %s23 = sphi 0, %s22
      %s39 = sphi 0, %s23
      %s43 = sphi 0, %s43
      %s45 = sphi 0, %s43
      %s46 = sphi 0, %s45
      %s60 = sphi 0, %s46
      %s64 = sphi 0, %s64
      %s66 = sphi 0, %s64
      %s67 = sphi 0, %s66
      %s81 = sphi 0, %s67
      %s87 = sphi 0, %s89
      %s90 = sphi 0, %s87
      %s91 = sphi 0, %s90
      %s107 = sphi 0, %s91
    $region4: #{forward.3} parent=1 // loop_header_branch
      %12 = sbr.rel (%p10) target = $region8
    $region5: #{forward.3} parent=1 // loop_body
      %s14 = ssub.s32 %s9, 1
      %s15 = ssub.s32 %s9, 2
      %s16 = sadd.s32 %s9, 1
      %s17 = ssub.s32 %s9, %s16
      %p18 = scmp.eq.s32.totalorder %s17, 0
      %s20 = sadd.s32 %s19, 1
      %s21 = scalar_select %p18, %s19, %s20
      %p24 = pneg %p18
      %p25 = scmp.eq.s32.totalorder %s9, 3
      %p26 = por %p24, %p25
      %p27 = scmp.ne.s32.totalorder %s19, %s22
      %p28 = scmp.eq.s32.totalorder %s9, 0
      %p29 = por %p27, %p28
      %p30 = scmp.ne.s32.totalorder %s19, %s22
      %p31 = scmp.eq.s32.totalorder %s14, 3
      %p32 = por %p30, %p31
      %p33 = scmp.ne.s32.totalorder %s22, %s23
      %p34 = scmp.eq.s32.totalorder %s14, 0
      %p35 = por %p33, %p34
      %p36 = scmp.ne.s32.totalorder %s22, %s23
      %p37 = scmp.eq.s32.totalorder %s15, 3
      %p38 = por %p36, %p37
      %p40 = scmp.ne.s32.totalorder %s23, %s39
      %p41 = scmp.eq.s32.totalorder %s15, 0
      %p42 = por %p40, %p41
      %s44 = sadd.s32 %s43, 1
      %p47 = scmp.eq.s32.totalorder %s9, 3
      %p48 = scmp.ne.s32.totalorder %s43, %s45
      %p49 = scmp.eq.s32.totalorder %s9, 0
      %p50 = por %p48, %p49
      %p51 = scmp.ne.s32.totalorder %s43, %s45
      %p52 = scmp.eq.s32.totalorder %s14, 3
      %p53 = por %p51, %p52
      %p54 = scmp.ne.s32.totalorder %s45, %s46
      %p55 = scmp.eq.s32.totalorder %s14, 0
      %p56 = por %p54, %p55
      %p57 = scmp.ne.s32.totalorder %s45, %s46
      %p58 = scmp.eq.s32.totalorder %s15, 3
      %p59 = por %p57, %p58
      %p61 = scmp.ne.s32.totalorder %s46, %s60
      %p62 = scmp.eq.s32.totalorder %s15, 0
      %p63 = por %p61, %p62
      %s65 = sadd.s32 %s64, 1
      %p68 = scmp.eq.s32.totalorder %s9, 3
      %p69 = scmp.ne.s32.totalorder %s64, %s66
      %p70 = scmp.eq.s32.totalorder %s9, 0
      %p71 = por %p69, %p70
      %p72 = scmp.ne.s32.totalorder %s64, %s66
      %p73 = scmp.eq.s32.totalorder %s14, 3
      %p74 = por %p72, %p73
      %p75 = scmp.ne.s32.totalorder %s66, %s67
      %p76 = scmp.eq.s32.totalorder %s14, 0
      %p77 = por %p75, %p76
      %p78 = scmp.ne.s32.totalorder %s66, %s67
      %p79 = scmp.eq.s32.totalorder %s15, 3
      %p80 = por %p78, %p79
      %p82 = scmp.ne.s32.totalorder %s67, %s81
      %p83 = scmp.eq.s32.totalorder %s15, 0
      %p84 = por %p82, %p83
      %s85 = ssub.s32 %s9, %s16
      %p86 = scmp.eq.s32.totalorder %s85, 0
      %s88 = sadd.s32 %s87, 1
      %s89 = scalar_select %p86, %s87, %s88
      %p92 = pneg %p86
      %p93 = scmp.eq.s32.totalorder %s9, 3
      %p94 = por %p92, %p93
      %p95 = scmp.ne.s32.totalorder %s87, %s90
      %p96 = scmp.eq.s32.totalorder %s9, 0
      %p97 = por %p95, %p96
      %p98 = scmp.ne.s32.totalorder %s87, %s90
      %p99 = scmp.eq.s32.totalorder %s14, 3
      %p100 = por %p98, %p99
      %p101 = scmp.ne.s32.totalorder %s90, %s91
      %p102 = scmp.eq.s32.totalorder %s14, 0
      %p103 = por %p101, %p102
      %p104 = scmp.ne.s32.totalorder %s90, %s91
      %p105 = scmp.eq.s32.totalorder %s15, 3
      %p106 = por %p104, %p105
      %p108 = scmp.ne.s32.totalorder %s91, %s107
      %p109 = scmp.eq.s32.totalorder %s15, 0
      %p110 = por %p108, %p109
      %p111 = scmp.le.s32.totalorder 1, %s9
      %p112 = scmp.lt.s32.totalorder %s9, 5
      %p113 = pnand %p111, %p112
      %p114 = pneg %p113
      // Predicated region
      $region9: #{forward.3} parent=5 // pred_check
        _
      $region10: #{forward.3} parent=5 // pred_check_branch
        %116 = sbr.rel (%p113) target = $region12
      $region11: #{forward.3} parent=5 // pred_region
        %s117 = ssub.s32 %s9, 1
        // Predicated region
        $region13: #{forward.3} parent=11 // pred_check
          %p118 = pneg %p56
        $region14: #{forward.3} parent=11 // pred_check_branch
          %120 = sbr.rel (%p118) target = $region16
        $region15: #{forward.3} parent=11 // pred_region
          _
        $region16: #{forward.3} parent=11 // pred_fallthru
          _
        // Predicated region
        $region17: #{forward.3} parent=11 // pred_check
          %p121 = pneg %p77
        $region18: #{forward.3} parent=11 // pred_check_branch
          %123 = sbr.rel (%p121) target = $region20
        $region19: #{forward.3} parent=11 // pred_region
          _
        $region20: #{forward.3} parent=11 // pred_fallthru
          _
      $region12: #{forward.3} parent=5 // pred_fallthru
        _
      %p124 = scmp.lt.s32.totalorder %s9, 4
      // Predicated region
      $region21: #{forward.3} parent=5 // pred_check
        %p125 = pneg %p124
      $region22: #{forward.3} parent=5 // pred_check_branch
        %127 = sbr.rel (%p125) target = $region24
      $region23: #{forward.3} parent=5 // pred_region
        // Predicated region
        $region25: #{forward.3} parent=23 // pred_check
          %p128 = pneg %p29
        $region26: #{forward.3} parent=23 // pred_check_branch
          %130 = sbr.rel (%p128) target = $region28
        $region27: #{forward.3} parent=23 // pred_region
          %s131 = sand.u32 %s19, 1
          %s132 = sand.u32 %s19, 1
          %s133 = smul.addr %s132, 160
          %s134 = scalar_lea.vmem [#allocation2], %s133
          %s135 = smul.u32 10, %s9
          %s136 = smul.addr %s135, 4
          %s137 = scalar_lea.vmem %s0, %s136
          // Predicated region
          $region29: #{forward.3} parent=27 // pred_check
            _
          $region30: #{forward.3} parent=27 // pred_check_branch
            %139 = sbr.rel (0) target = $region32
          $region31: #{forward.3} parent=27 // pred_region
            // Predicated region
            $region33: #{forward.3} parent=31 // pred_check
              _
            $region34: #{forward.3} parent=31 // pred_check_branch
              %141 = sbr.rel target = $region36
            $region35: #{forward.3} parent=31 // pred_region
              // Predicated region
              $region48: #{forward.3} parent=35 // pred_check
                _
              $region49: #{forward.3} parent=35 // pred_check_branch
                %234 = sbr.rel (0) target = $region51
              $region50: #{forward.3} parent=35 // pred_region
                loop: start=0, step=1, limit=1
                $region52: #{forward.3} parent=50 // loop_pre_header
                  _
                $region53: #{forward.3} parent=50 // loop_header
                  %s236 = sphi 0, %s240
                  %p237 = scmp.ge.s32.totalorder %s236, 1
                  %s241 = sphi %s137, %s137
                  %s242 = sphi %s134, %s134
                $region54: #{forward.3} parent=50 // loop_header_branch
                  %239 = sbr.rel (%p237) target = $region58
                $region55: #{forward.3} parent=50 // loop_body
                  _
                $region56: #{forward.3} parent=50 // loop_footer
                  %s240 = sadd.s32 1, %s236
                $region57: #{forward.3} parent=50 // loop_footer_branch
                  %235 = sbr.rel target = $region53
                $region58: #{forward.3} parent=50 // loop_exit
                  _
                loop: start=0, step=1, limit=1
                $region59: #{forward.3} parent=50 // loop_pre_header
                  _
                $region60: #{forward.3} parent=50 // loop_header
                  %s245 = sphi 0, %s249
                  %p246 = scmp.ge.s32.totalorder %s245, 1
                  %s250 = sphi %s137, %s137
                  %s251 = sphi %s134, %s134
                $region61: #{forward.3} parent=50 // loop_header_branch
                  %248 = sbr.rel (%p246) target = $region65
                $region62: #{forward.3} parent=50 // loop_body
                  %v252 = vld [vmem:[%s250] sm:$0xf]
                  %253 = vst [vmem:[%s251] sm:$0xf] %v252
                  %v254 = vld [vmem:[%s250 + $0x4] sm:$0xf]
                  %255 = vst [vmem:[%s251 + $0x4] sm:$0xf] %v254
                  %v256 = vld [vmem:[%s250 + $0x8] sm:$0xf]
                  %257 = vst [vmem:[%s251 + $0x8] sm:$0xf] %v256
                  %v258 = vld [vmem:[%s250 + $0xc] sm:$0xf]
                  %259 = vst [vmem:[%s251 + $0xc] sm:$0xf] %v258
                  %v260 = vld [vmem:[%s250 + $0x10] sm:$0xf]
                  %261 = vst [vmem:[%s251 + $0x10] sm:$0xf] %v260
                  %v262 = vld [vmem:[%s250 + $0x14] sm:$0xf]
                  %263 = vst [vmem:[%s251 + $0x14] sm:$0xf] %v262
                  %v264 = vld [vmem:[%s250 + $0x18] sm:$0xf]
                  %265 = vst [vmem:[%s251 + $0x18] sm:$0xf] %v264
                  %v266 = vld [vmem:[%s250 + $0x1c] sm:$0xf]
                  %267 = vst [vmem:[%s251 + $0x1c] sm:$0xf] %v266
                  %v268 = vld [vmem:[%s250 + $0x20] sm:$0xf]
                  %269 = vst [vmem:[%s251 + $0x20] sm:$0xf] %v268
                  %v270 = vld [vmem:[%s250 + $0x24] sm:$0xf]
                  %271 = vst [vmem:[%s251 + $0x24] sm:$0xf] %v270
                  %v272 = vld [vmem:[%s250 + $0xa0] sm:$0xf]
                  %273 = vst [vmem:[%s251 + $0x28] sm:$0xf] %v272
                  %v274 = vld [vmem:[%s250 + $0xa4] sm:$0xf]
                  %275 = vst [vmem:[%s251 + $0x2c] sm:$0xf] %v274
                  %v276 = vld [vmem:[%s250 + $0xa8] sm:$0xf]
                  %277 = vst [vmem:[%s251 + $0x30] sm:$0xf] %v276
                  %v278 = vld [vmem:[%s250 + $0xac] sm:$0xf]
                  %279 = vst [vmem:[%s251 + $0x34] sm:$0xf] %v278
                  %v280 = vld [vmem:[%s250 + $0xb0] sm:$0xf]
                  %281 = vst [vmem:[%s251 + $0x38] sm:$0xf] %v280
                  %v282 = vld [vmem:[%s250 + $0xb4] sm:$0xf]
                  %283 = vst [vmem:[%s251 + $0x3c] sm:$0xf] %v282
                  %v284 = vld [vmem:[%s250 + $0xb8] sm:$0xf]
                  %285 = vst [vmem:[%s251 + $0x40] sm:$0xf] %v284
                  %v286 = vld [vmem:[%s250 + $0xbc] sm:$0xf]
                  %287 = vst [vmem:[%s251 + $0x44] sm:$0xf] %v286
                  %v288 = vld [vmem:[%s250 + $0xc0] sm:$0xf]
                  %289 = vst [vmem:[%s251 + $0x48] sm:$0xf] %v288
                  %v290 = vld [vmem:[%s250 + $0xc4] sm:$0xf]
                  %291 = vst [vmem:[%s251 + $0x4c] sm:$0xf] %v290
                  %v292 = vld [vmem:[%s250 + $0x140] sm:$0xf]
                  %293 = vst [vmem:[%s251 + $0x50] sm:$0xf] %v292
                  %v294 = vld [vmem:[%s250 + $0x144] sm:$0xf]
                  %295 = vst [vmem:[%s251 + $0x54] sm:$0xf] %v294
                  %v296 = vld [vmem:[%s250 + $0x148] sm:$0xf]
                  %297 = vst [vmem:[%s251 + $0x58] sm:$0xf] %v296
                  %v298 = vld [vmem:[%s250 + $0x14c] sm:$0xf]
                  %299 = vst [vmem:[%s251 + $0x5c] sm:$0xf] %v298
                  %v300 = vld [vmem:[%s250 + $0x150] sm:$0xf]
                  %301 = vst [vmem:[%s251 + $0x60] sm:$0xf] %v300
                  %v302 = vld [vmem:[%s250 + $0x154] sm:$0xf]
                  %303 = vst [vmem:[%s251 + $0x64] sm:$0xf] %v302
                  %v304 = vld [vmem:[%s250 + $0x158] sm:$0xf]
                  %305 = vst [vmem:[%s251 + $0x68] sm:$0xf] %v304
                  %v306 = vld [vmem:[%s250 + $0x15c] sm:$0xf]
                  %307 = vst [vmem:[%s251 + $0x6c] sm:$0xf] %v306
                  %v308 = vld [vmem:[%s250 + $0x160] sm:$0xf]
                  %309 = vst [vmem:[%s251 + $0x70] sm:$0xf] %v308
                  %v310 = vld [vmem:[%s250 + $0x164] sm:$0xf]
                  %311 = vst [vmem:[%s251 + $0x74] sm:$0xf] %v310
                  %v312 = vld [vmem:[%s250 + $0x1e0] sm:$0xf]
                  %313 = vst [vmem:[%s251 + $0x78] sm:$0xf] %v312
                  %v314 = vld [vmem:[%s250 + $0x1e4] sm:$0xf]
                  %315 = vst [vmem:[%s251 + $0x7c] sm:$0xf] %v314
                  %v316 = vld [vmem:[%s250 + $0x1e8] sm:$0xf]
                  %317 = vst [vmem:[%s251 + $0x80] sm:$0xf] %v316
                  %v318 = vld [vmem:[%s250 + $0x1ec] sm:$0xf]
                  %319 = vst [vmem:[%s251 + $0x84] sm:$0xf] %v318
                  %v320 = vld [vmem:[%s250 + $0x1f0] sm:$0xf]
                  %321 = vst [vmem:[%s251 + $0x88] sm:$0xf] %v320
                  %v322 = vld [vmem:[%s250 + $0x1f4] sm:$0xf]
                  %323 = vst [vmem:[%s251 + $0x8c] sm:$0xf] %v322
                  %v324 = vld [vmem:[%s250 + $0x1f8] sm:$0xf]
                  %325 = vst [vmem:[%s251 + $0x90] sm:$0xf] %v324
                  %v326 = vld [vmem:[%s250 + $0x1fc] sm:$0xf]
                  %327 = vst [vmem:[%s251 + $0x94] sm:$0xf] %v326
                  %v328 = vld [vmem:[%s250 + $0x200] sm:$0xf]
                  %329 = vst [vmem:[%s251 + $0x98] sm:$0xf] %v328
                  %v330 = vld [vmem:[%s250 + $0x204] sm:$0xf]
                  %331 = vst [vmem:[%s251 + $0x9c] sm:$0xf] %v330
                $region63: #{forward.3} parent=50 // loop_footer
                  %s249 = sadd.s32 1, %s245
                $region64: #{forward.3} parent=50 // loop_footer_branch
                  %244 = sbr.rel target = $region60
                $region65: #{forward.3} parent=50 // loop_exit
                  _
              $region51: #{forward.3} parent=35 // pred_fallthru
                _
            $region36: #{forward.3} parent=31 // pred_fallthru
              _
            // Predicated region
            $region37: #{forward.3} parent=31 // pred_check
              _
            $region38: #{forward.3} parent=31 // pred_check_branch
              %143 = sbr.rel (0) target = $region40
            $region39: #{forward.3} parent=31 // pred_region
              loop: start=0, step=1, limit=1
              $region41: #{forward.3} parent=39 // loop_pre_header
                _
              $region42: #{forward.3} parent=39 // loop_header
                %s146 = sphi 0, %s150
                %p147 = scmp.ge.s32.totalorder %s146, 1
                %s151 = sphi %s137, %s137
                %s152 = sphi %s134, %s134
              $region43: #{forward.3} parent=39 // loop_header_branch
                %149 = sbr.rel (%p147) target = $region47
              $region44: #{forward.3} parent=39 // loop_body
                %v153 = vld [vmem:[%s151] sm:$0xf]
                %154 = vst [vmem:[%s152] sm:$0xf] %v153
                %v155 = vld [vmem:[%s151 + $0x4] sm:$0xf]
                %156 = vst [vmem:[%s152 + $0x4] sm:$0xf] %v155
                %v157 = vld [vmem:[%s151 + $0x8] sm:$0xf]
                %158 = vst [vmem:[%s152 + $0x8] sm:$0xf] %v157
                %v159 = vld [vmem:[%s151 + $0xc] sm:$0xf]
                %160 = vst [vmem:[%s152 + $0xc] sm:$0xf] %v159
                %v161 = vld [vmem:[%s151 + $0x10] sm:$0xf]
                %162 = vst [vmem:[%s152 + $0x10] sm:$0xf] %v161
                %v163 = vld [vmem:[%s151 + $0x14] sm:$0xf]
                %164 = vst [vmem:[%s152 + $0x14] sm:$0xf] %v163
                %v165 = vld [vmem:[%s151 + $0x18] sm:$0xf]
                %166 = vst [vmem:[%s152 + $0x18] sm:$0xf] %v165
                %v167 = vld [vmem:[%s151 + $0x1c] sm:$0xf]
                %168 = vst [vmem:[%s152 + $0x1c] sm:$0xf] %v167
                %v169 = vld [vmem:[%s151 + $0x20] sm:$0xf]
                %170 = vst [vmem:[%s152 + $0x20] sm:$0xf] %v169
                %v171 = vld [vmem:[%s151 + $0x24] sm:$0xf]
                %172 = vst [vmem:[%s152 + $0x24] sm:$0xf] %v171
                %v173 = vld [vmem:[%s151 + $0xa0] sm:$0xf]
                %174 = vst [vmem:[%s152 + $0x28] sm:$0xf] %v173
                %v175 = vld [vmem:[%s151 + $0xa4] sm:$0xf]
                %176 = vst [vmem:[%s152 + $0x2c] sm:$0xf] %v175
                %v177 = vld [vmem:[%s151 + $0xa8] sm:$0xf]
                %178 = vst [vmem:[%s152 + $0x30] sm:$0xf] %v177
                %v179 = vld [vmem:[%s151 + $0xac] sm:$0xf]
                %180 = vst [vmem:[%s152 + $0x34] sm:$0xf] %v179
                %v181 = vld [vmem:[%s151 + $0xb0] sm:$0xf]
                %182 = vst [vmem:[%s152 + $0x38] sm:$0xf] %v181
                %v183 = vld [vmem:[%s151 + $0xb4] sm:$0xf]
                %184 = vst [vmem:[%s152 + $0x3c] sm:$0xf] %v183
                %v185 = vld [vmem:[%s151 + $0xb8] sm:$0xf]
                %186 = vst [vmem:[%s152 + $0x40] sm:$0xf] %v185
                %v187 = vld [vmem:[%s151 + $0xbc] sm:$0xf]
                %188 = vst [vmem:[%s152 + $0x44] sm:$0xf] %v187
                %v189 = vld [vmem:[%s151 + $0xc0] sm:$0xf]
                %190 = vst [vmem:[%s152 + $0x48] sm:$0xf] %v189
                %v191 = vld [vmem:[%s151 + $0xc4] sm:$0xf]
                %192 = vst [vmem:[%s152 + $0x4c] sm:$0xf] %v191
                %v193 = vld [vmem:[%s151 + $0x140] sm:$0xf]
                %194 = vst [vmem:[%s152 + $0x50] sm:$0xf] %v193
                %v195 = vld [vmem:[%s151 + $0x144] sm:$0xf]
                %196 = vst [vmem:[%s152 + $0x54] sm:$0xf] %v195
                %v197 = vld [vmem:[%s151 + $0x148] sm:$0xf]
                %198 = vst [vmem:[%s152 + $0x58] sm:$0xf] %v197
                %v199 = vld [vmem:[%s151 + $0x14c] sm:$0xf]
                %200 = vst [vmem:[%s152 + $0x5c] sm:$0xf] %v199
                %v201 = vld [vmem:[%s151 + $0x150] sm:$0xf]
                %202 = vst [vmem:[%s152 + $0x60] sm:$0xf] %v201
                %v203 = vld [vmem:[%s151 + $0x154] sm:$0xf]
                %204 = vst [vmem:[%s152 + $0x64] sm:$0xf] %v203
                %v205 = vld [vmem:[%s151 + $0x158] sm:$0xf]
                %206 = vst [vmem:[%s152 + $0x68] sm:$0xf] %v205
                %v207 = vld [vmem:[%s151 + $0x15c] sm:$0xf]
                %208 = vst [vmem:[%s152 + $0x6c] sm:$0xf] %v207
                %v209 = vld [vmem:[%s151 + $0x160] sm:$0xf]
                %210 = vst [vmem:[%s152 + $0x70] sm:$0xf] %v209
                %v211 = vld [vmem:[%s151 + $0x164] sm:$0xf]
                %212 = vst [vmem:[%s152 + $0x74] sm:$0xf] %v211
                %v213 = vld [vmem:[%s151 + $0x1e0] sm:$0xf]
                %214 = vst [vmem:[%s152 + $0x78] sm:$0xf] %v213
                %v215 = vld [vmem:[%s151 + $0x1e4] sm:$0xf]
                %216 = vst [vmem:[%s152 + $0x7c] sm:$0xf] %v215
                %v217 = vld [vmem:[%s151 + $0x1e8] sm:$0xf]
                %218 = vst [vmem:[%s152 + $0x80] sm:$0xf] %v217
                %v219 = vld [vmem:[%s151 + $0x1ec] sm:$0xf]
                %220 = vst [vmem:[%s152 + $0x84] sm:$0xf] %v219
                %v221 = vld [vmem:[%s151 + $0x1f0] sm:$0xf]
                %222 = vst [vmem:[%s152 + $0x88] sm:$0xf] %v221
                %v223 = vld [vmem:[%s151 + $0x1f4] sm:$0xf]
                %224 = vst [vmem:[%s152 + $0x8c] sm:$0xf] %v223
                %v225 = vld [vmem:[%s151 + $0x1f8] sm:$0xf]
                %226 = vst [vmem:[%s152 + $0x90] sm:$0xf] %v225
                %v227 = vld [vmem:[%s151 + $0x1fc] sm:$0xf]
                %228 = vst [vmem:[%s152 + $0x94] sm:$0xf] %v227
                %v229 = vld [vmem:[%s151 + $0x200] sm:$0xf]
                %230 = vst [vmem:[%s152 + $0x98] sm:$0xf] %v229
                %v231 = vld [vmem:[%s151 + $0x204] sm:$0xf]
                %232 = vst [vmem:[%s152 + $0x9c] sm:$0xf] %v231
              $region45: #{forward.3} parent=39 // loop_footer
                %s150 = sadd.s32 1, %s146
              $region46: #{forward.3} parent=39 // loop_footer_branch
                %145 = sbr.rel target = $region42
              $region47: #{forward.3} parent=39 // loop_exit
                _
            $region40: #{forward.3} parent=31 // pred_fallthru
              _
          $region32: #{forward.3} parent=27 // pred_fallthru
            _
          %332 = vnop
        $region28: #{forward.3} parent=23 // pred_fallthru
          _
      $region24: #{forward.3} parent=5 // pred_fallthru
        _
      %p333 = scmp.le.s32.totalorder 1, %s9
      %p334 = scmp.lt.s32.totalorder %s9, 5
      %p335 = pnand %p333, %p334
      %p336 = pneg %p335
      // Predicated region
      $region66: #{forward.3} parent=5 // pred_check
        _
      $region67: #{forward.3} parent=5 // pred_check_branch
        %338 = sbr.rel (%p335) target = $region69
      $region68: #{forward.3} parent=5 // pred_region
        %s339 = ssub.s32 %s9, 1
        %s340 = sand.u32 %s22, 1
        %s341 = sand.u32 %s22, 1
        %s342 = smul.addr %s341, 160
        %s343 = scalar_lea.vmem [#allocation2], %s342
        // Predicated region
        $region70: #{forward.3} parent=68 // pred_check
          %p344 = pneg %p35
        $region71: #{forward.3} parent=68 // pred_check_branch
          %346 = sbr.rel (%p344) target = $region73
        $region72: #{forward.3} parent=68 // pred_region
          _
        $region73: #{forward.3} parent=68 // pred_fallthru
          _
        %s347 = sand.u32 %s22, 1
        %s348 = sand.u32 %s22, 1
        %s349 = smul.addr %s348, 160
        %s350 = scalar_lea.vmem [#allocation2], %s349
        %p351 = pneg %p35
        %p352 = pneg %p32
        %p353 = pneg %p56
        %p354 = pneg %p53
        %p355 = pneg %p77
        %p356 = pneg %p74
        %p357 = pneg %p103
        %p358 = pneg %p100
        %s359 = smul.u32 10, %s14
        %p360 = scmp.lt.s32.totalorder %s359, 39
        %s361 = scalar_select %p360, %s359, 39
        %s362 = smul.addr %s361, 4
        %s363 = scalar_lea.vmem %s3, %s362
        %s364 = smul.u32 10, %s14
        %s365 = smul.u32 10, %s14
        %p366 = scmp.lt.s32.totalorder %s365, 39
        %s367 = scalar_select %p366, %s365, 39
        %s368 = smul.addr %s367, 4
        %s369 = scalar_lea.vmem %s3, %s368
        %s370 = smul.u32 10, %s14
        %v372 = vld [vmem:[%s1] sm:$0xf]
        %v373 = vld [vmem:[%s1 + $0x4] sm:$0xf]
        %v374 = vld [vmem:[%s1 + $0x8] sm:$0xf]
        %v375 = vld [vmem:[%s1 + $0xc] sm:$0x1]
        %v376 = vld [vmem:[%s343] sm:$0xf]
        %v377 = vld [vmem:[%s343 + $0x4] sm:$0xf]
        %v378 = vld [vmem:[%s343 + $0x8] sm:$0xf]
        %v379 = vld [vmem:[%s343 + $0xc] sm:$0xf]
        %v380 = vld [vmem:[%s343 + $0x10] sm:$0xf]
        %v381 = vld [vmem:[%s343 + $0x14] sm:$0xf]
        %v382 = vld [vmem:[%s343 + $0x18] sm:$0xf]
        %v383 = vld [vmem:[%s343 + $0x1c] sm:$0xf]
        %v384 = vld [vmem:[%s343 + $0x20] sm:$0xf]
        %v385 = vld [vmem:[%s343 + $0x24] sm:$0xf]
        %v396 = vunpack.c.l.b16 %v376
        %v397 = vunpack.c.l.b16 %v377
        %v398 = vunpack.c.l.b16 %v378
        %v399 = vunpack.c.l.b16 %v379
        %v400 = vunpack.c.l.b16 %v380
        %v401 = vunpack.c.l.b16 %v381
        %v402 = vunpack.c.l.b16 %v382
        %v403 = vunpack.c.l.b16 %v383
        %v404 = vunpack.c.l.b16 %v384
        %v405 = vunpack.c.l.b16 %v385
        %v406 = vpack.c.b16 %v397, %v396
        %v407 = vpack.c.b16 %v399, %v398
        %v408 = vpack.c.b16 %v401, %v400
        %v409 = vpack.c.b16 %v403, %v402
        %v410 = vpack.c.b16 %v405, %v404
        %v415 = vunpack.c.l.b16 %v372
        %v416 = vunpack.c.l.b16 %v373
        %v417 = vunpack.c.l.b16 %v374
        %v418 = vunpack.c.l.b16 %v375
        %v419 = vpack.c.b16 %v416, %v415
        %v420 = vpack.c.b16 %v418, %v417
        %vm422 = vcmask 203776
        %v424 = vsel %vm422, %v406, 0
        %v427 = vsel %vm422, %v407, 0
        %v430 = vsel %vm422, %v408, 0
        %v433 = vsel %vm422, %v409, 0
        %v436 = vsel %vm422, %v410, 0
        %vm438 = vcmask 1043456
        %vm439 = vcmask 1044480
        %v440 = vsel %vm438, 4294967295, 65535
        %v441 = vsel %vm439, %v440, 0
        %v443 = vand.u32 %v420, %v441
        %445 = vmatprep.subr.bf16.mxu0 0
        %446 = vmatpush1.bf16.msra.mxu0 %v419
        %447 = vmatprep.subr.bf16.mxu0 0
        %448 = vmatpush1.bf16.msra.mxu0 %v443
        %449 = vmatprep.subr.bf16.mxu0 0
        %450 = vmatpush1.bf16.msra.mxu0 0
        %451 = vmatprep.subr.bf16.mxu0 0
        %452 = vmatpush1.bf16.msra.mxu0 0
        %453 = vmatprep.subr.bf16.mxu0 0
        %454 = vmatpush1.bf16.msra.mxu0 0
        %455 = vmatprep.subr.bf16.mxu0 0
        %456 = vmatpush1.bf16.msra.mxu0 0
        %457 = vmatprep.subr.bf16.mxu0 0
        %458 = vmatpush1.bf16.msra.mxu0 0
        %459 = vmatprep.subr.bf16.mxu0 0
        %460 = vmatpush1.bf16.msra.mxu0 0
        %461 = vmatprep.subr.bf16.mxu0 0
        %462 = vmatpush1.bf16.msra.mxu0 0
        %463 = vmatprep.subr.bf16.mxu0 0
        %464 = vmatpush1.bf16.msra.mxu0 0
        %465 = vmatprep.subr.bf16.mxu0 0
        %466 = vmatpush1.bf16.msra.mxu0 0
        %467 = vmatprep.subr.bf16.mxu0 0
        %468 = vmatpush1.bf16.msra.mxu0 0
        %469 = vmatprep.subr.bf16.mxu0 0
        %470 = vmatpush1.bf16.msra.mxu0 0
        %471 = vmatprep.subr.bf16.mxu0 0
        %472 = vmatpush1.bf16.msra.mxu0 0
        %473 = vmatprep.subr.bf16.mxu0 0
        %474 = vmatpush1.bf16.msra.mxu0 0
        %475 = vmatprep.subr.bf16.mxu0 0
        %476 = vmatpush1.bf16.msra.mxu0 0
        %477 = vmatprep.mubr.bf16.mxu0 0
        %478 = vmatmul.mubr.bf16.gmra.mrb[0].mxu0 %v424
        %v479 = vpop.f32.mrb[0].mxu0
        %v480 = vadd.f32 0.0, %v479
        %v481 = vpop.f32.mrb[0].mxu0
        %v482 = vpop.f32.mrb[0].mxu0
        %v483 = vadd.f32 0.0, %v482
        %v484 = vpop.f32.mrb[0].mxu0
        %485 = vmatprep.mubr.bf16.mxu0 0
        %486 = vmatmul.mubr.bf16.gmra.mrb[0].mxu0 %v427
        %v487 = vpop.f32.mrb[0].mxu0
        %v488 = vadd.f32 0.0, %v487
        %v489 = vpop.f32.mrb[0].mxu0
        %v490 = vpop.f32.mrb[0].mxu0
        %v491 = vadd.f32 0.0, %v490
        %v492 = vpop.f32.mrb[0].mxu0
        %493 = vmatprep.mubr.bf16.mxu0 0
        %494 = vmatmul.mubr.bf16.gmra.mrb[0].mxu0 %v430
        %v495 = vpop.f32.mrb[0].mxu0
        %v496 = vadd.f32 0.0, %v495
        %v497 = vpop.f32.mrb[0].mxu0
        %v498 = vpop.f32.mrb[0].mxu0
        %v499 = vadd.f32 0.0, %v498
        %v500 = vpop.f32.mrb[0].mxu0
        %501 = vmatprep.mubr.bf16.mxu0 0
        %502 = vmatmul.mubr.bf16.gmra.mrb[0].mxu0 %v433
        %v503 = vpop.f32.mrb[0].mxu0
        %v504 = vadd.f32 0.0, %v503
        %v505 = vpop.f32.mrb[0].mxu0
        %v506 = vpop.f32.mrb[0].mxu0
        %v507 = vadd.f32 0.0, %v506
        %v508 = vpop.f32.mrb[0].mxu0
        %509 = vmatprep.mubr.bf16.mxu0 0
        %510 = vmatmul.mubr.bf16.gmra.mrb[0].mxu0 %v436
        %v511 = vpop.f32.mrb[0].mxu0
        %v512 = vadd.f32 0.0, %v511
        %v513 = vpop.f32.mrb[0].mxu0
        %v514 = vpop.f32.mrb[0].mxu0
        %v515 = vadd.f32 0.0, %v514
        %v516 = vpop.f32.mrb[0].mxu0
        %517 = vdwg.mxu0
        %s518 = scalar_lea.vmem %s343, 40 [#allocation2]
        %v519 = vld [vmem:[%s518] sm:$0xf]
        %v520 = vld [vmem:[%s518 + $0x4] sm:$0xf]
        %v521 = vld [vmem:[%s518 + $0x8] sm:$0xf]
        %v522 = vld [vmem:[%s518 + $0xc] sm:$0xf]
        %v523 = vld [vmem:[%s518 + $0x10] sm:$0xf]
        %v524 = vld [vmem:[%s518 + $0x14] sm:$0xf]
        %v525 = vld [vmem:[%s518 + $0x18] sm:$0xf]
        %v526 = vld [vmem:[%s518 + $0x1c] sm:$0xf]
        %v527 = vld [vmem:[%s518 + $0x20] sm:$0xf]
        %v528 = vld [vmem:[%s518 + $0x24] sm:$0xf]
        %v539 = vunpack.c.l.b16 %v519
        %v540 = vunpack.c.l.b16 %v520
        %v541 = vunpack.c.l.b16 %v521
        %v542 = vunpack.c.l.b16 %v522
        %v543 = vunpack.c.l.b16 %v523
        %v544 = vunpack.c.l.b16 %v524
        %v545 = vunpack.c.l.b16 %v525
        %v546 = vunpack.c.l.b16 %v526
        %v547 = vunpack.c.l.b16 %v527
        %v548 = vunpack.c.l.b16 %v528
        %v549 = vpack.c.b16 %v540, %v539
        %v550 = vpack.c.b16 %v542, %v541
        %v551 = vpack.c.b16 %v544, %v543
        %v552 = vpack.c.b16 %v546, %v545
        %v553 = vpack.c.b16 %v548, %v547
        %v555 = vsel %vm422, %v549, 0
        %v558 = vsel %vm422, %v550, 0
        %v561 = vsel %vm422, %v551, 0
        %v564 = vsel %vm422, %v552, 0
        %v567 = vsel %vm422, %v553, 0
        %569 = vmatprep.subr.bf16.mxu0 0
        %570 = vmatpush1.bf16.msra.mxu0 %v419
        %571 = vmatprep.subr.bf16.mxu0 0
        %572 = vmatpush1.bf16.msra.mxu0 %v443
        %573 = vmatprep.subr.bf16.mxu0 0
        %574 = vmatpush1.bf16.msra.mxu0 0
        %575 = vmatprep.subr.bf16.mxu0 0
        %576 = vmatpush1.bf16.msra.mxu0 0
        %577 = vmatprep.subr.bf16.mxu0 0
        %578 = vmatpush1.bf16.msra.mxu0 0
        %579 = vmatprep.subr.bf16.mxu0 0
        %580 = vmatpush1.bf16.msra.mxu0 0
        %581 = vmatprep.subr.bf16.mxu0 0
        %582 = vmatpush1.bf16.msra.mxu0 0
        %583 = vmatprep.subr.bf16.mxu0 0
        %584 = vmatpush1.bf16.msra.mxu0 0
        %585 = vmatprep.subr.bf16.mxu0 0
        %586 = vmatpush1.bf16.msra.mxu0 0
        %587 = vmatprep.subr.bf16.mxu0 0
        %588 = vmatpush1.bf16.msra.mxu0 0
        %589 = vmatprep.subr.bf16.mxu0 0
        %590 = vmatpush1.bf16.msra.mxu0 0
        %591 = vmatprep.subr.bf16.mxu0 0
        %592 = vmatpush1.bf16.msra.mxu0 0
        %593 = vmatprep.subr.bf16.mxu0 0
        %594 = vmatpush1.bf16.msra.mxu0 0
        %595 = vmatprep.subr.bf16.mxu0 0
        %596 = vmatpush1.bf16.msra.mxu0 0
        %597 = vmatprep.subr.bf16.mxu0 0
        %598 = vmatpush1.bf16.msra.mxu0 0
        %599 = vmatprep.subr.bf16.mxu0 0
        %600 = vmatpush1.bf16.msra.mxu0 0
        %601 = vmatprep.mubr.bf16.mxu0 0
        %602 = vmatmul.mubr.bf16.gmra.mrb[0].mxu0 %v555
        %v603 = vpop.f32.mrb[0].mxu0
        %v604 = vadd.f32 0.0, %v603
        %v605 = vpop.f32.mrb[0].mxu0
        %v606 = vpop.f32.mrb[0].mxu0
        %v607 = vadd.f32 0.0, %v606
        %v608 = vpop.f32.mrb[0].mxu0
        %609 = vmatprep.mubr.bf16.mxu0 0
        %610 = vmatmul.mubr.bf16.gmra.mrb[0].mxu0 %v558
        %v611 = vpop.f32.mrb[0].mxu0
        %v612 = vadd.f32 0.0, %v611
        %v613 = vpop.f32.mrb[0].mxu0
        %v614 = vpop.f32.mrb[0].mxu0
        %v615 = vadd.f32 0.0, %v614
        %v616 = vpop.f32.mrb[0].mxu0
        %617 = vmatprep.mubr.bf16.mxu0 0
        %618 = vmatmul.mubr.bf16.gmra.mrb[0].mxu0 %v561
        %v619 = vpop.f32.mrb[0].mxu0
        %v620 = vadd.f32 0.0, %v619
        %v621 = vpop.f32.mrb[0].mxu0
        %v622 = vpop.f32.mrb[0].mxu0
        %v623 = vadd.f32 0.0, %v622
        %v624 = vpop.f32.mrb[0].mxu0
        %625 = vmatprep.mubr.bf16.mxu0 0
        %626 = vmatmul.mubr.bf16.gmra.mrb[0].mxu0 %v564
        %v627 = vpop.f32.mrb[0].mxu0
        %v628 = vadd.f32 0.0, %v627
        %v629 = vpop.f32.mrb[0].mxu0
        %v630 = vpop.f32.mrb[0].mxu0
        %v631 = vadd.f32 0.0, %v630
        %v632 = vpop.f32.mrb[0].mxu0
        %633 = vmatprep.mubr.bf16.mxu0 0
        %634 = vmatmul.mubr.bf16.gmra.mrb[0].mxu0 %v567
        %v635 = vpop.f32.mrb[0].mxu0
        %v636 = vadd.f32 0.0, %v635
        %v637 = vpop.f32.mrb[0].mxu0
        %v638 = vpop.f32.mrb[0].mxu0
        %v639 = vadd.f32 0.0, %v638
        %v640 = vpop.f32.mrb[0].mxu0
        %641 = vdwg.mxu0
        %v642 = vmax.f32 %v480, %v604
        %v643 = vmax.f32 %v483, %v607
        %v644 = vmax.f32 %v488, %v612
        %v645 = vmax.f32 %v491, %v615
        %v646 = vmax.f32 %v496, %v620
        %v647 = vmax.f32 %v499, %v623
        %v648 = vmax.f32 %v504, %v628
        %v649 = vmax.f32 %v507, %v631
        %v650 = vmax.f32 %v512, %v636
        %v651 = vmax.f32 %v515, %v639
        %s652 = scalar_lea.vmem %s343, 80 [#allocation2]
        %v653 = vld [vmem:[%s652] sm:$0xf]
        %v654 = vld [vmem:[%s652 + $0x4] sm:$0xf]
        %v655 = vld [vmem:[%s652 + $0x8] sm:$0xf]
        %v656 = vld [vmem:[%s652 + $0xc] sm:$0xf]
        %v657 = vld [vmem:[%s652 + $0x10] sm:$0xf]
        %v658 = vld [vmem:[%s652 + $0x14] sm:$0xf]
        %v659 = vld [vmem:[%s652 + $0x18] sm:$0xf]
        %v660 = vld [vmem:[%s652 + $0x1c] sm:$0xf]
        %v661 = vld [vmem:[%s652 + $0x20] sm:$0xf]
        %v662 = vld [vmem:[%s652 + $0x24] sm:$0xf]
        %v673 = vunpack.c.l.b16 %v653
        %v674 = vunpack.c.l.b16 %v654
        %v675 = vunpack.c.l.b16 %v655
        %v676 = vunpack.c.l.b16 %v656
        %v677 = vunpack.c.l.b16 %v657
        %v678 = vunpack.c.l.b16 %v658
        %v679 = vunpack.c.l.b16 %v659
        %v680 = vunpack.c.l.b16 %v660
        %v681 = vunpack.c.l.b16 %v661
        %v682 = vunpack.c.l.b16 %v662
        %v683 = vpack.c.b16 %v674, %v673
        %v684 = vpack.c.b16 %v676, %v675
        %v685 = vpack.c.b16 %v678, %v677
        %v686 = vpack.c.b16 %v680, %v679
        %v687 = vpack.c.b16 %v682, %v681
        %v689 = vsel %vm422, %v683, 0
        %v692 = vsel %vm422, %v684, 0
        %v695 = vsel %vm422, %v685, 0
        %v698 = vsel %vm422, %v686, 0
        %v701 = vsel %vm422, %v687, 0
        %703 = vmatprep.subr.bf16.mxu0 0
        %704 = vmatpush1.bf16.msra.mxu0 %v419
        %705 = vmatprep.subr.bf16.mxu0 0
        %706 = vmatpush1.bf16.msra.mxu0 %v443
        %707 = vmatprep.subr.bf16.mxu0 0
        %708 = vmatpush1.bf16.msra.mxu0 0
        %709 = vmatprep.subr.bf16.mxu0 0
        %710 = vmatpush1.bf16.msra.mxu0 0
        %711 = vmatprep.subr.bf16.mxu0 0
        %712 = vmatpush1.bf16.msra.mxu0 0
        %713 = vmatprep.subr.bf16.mxu0 0
        %714 = vmatpush1.bf16.msra.mxu0 0
        %715 = vmatprep.subr.bf16.mxu0 0
        %716 = vmatpush1.bf16.msra.mxu0 0
        %717 = vmatprep.subr.bf16.mxu0 0
        %718 = vmatpush1.bf16.msra.mxu0 0
        %719 = vmatprep.subr.bf16.mxu0 0
        %720 = vmatpush1.bf16.msra.mxu0 0
        %721 = vmatprep.subr.bf16.mxu0 0
        %722 = vmatpush1.bf16.msra.mxu0 0
        %723 = vmatprep.subr.bf16.mxu0 0
        %724 = vmatpush1.bf16.msra.mxu0 0
        %725 = vmatprep.subr.bf16.mxu0 0
        %726 = vmatpush1.bf16.msra.mxu0 0
        %727 = vmatprep.subr.bf16.mxu0 0
        %728 = vmatpush1.bf16.msra.mxu0 0
        %729 = vmatprep.subr.bf16.mxu0 0
        %730 = vmatpush1.bf16.msra.mxu0 0
        %731 = vmatprep.subr.bf16.mxu0 0
        %732 = vmatpush1.bf16.msra.mxu0 0
        %733 = vmatprep.subr.bf16.mxu0 0
        %734 = vmatpush1.bf16.msra.mxu0 0
        %735 = vmatprep.mubr.bf16.mxu0 0
        %736 = vmatmul.mubr.bf16.gmra.mrb[0].mxu0 %v689
        %v737 = vpop.f32.mrb[0].mxu0
        %v738 = vadd.f32 0.0, %v737
        %v739 = vpop.f32.mrb[0].mxu0
        %v740 = vpop.f32.mrb[0].mxu0
        %v741 = vadd.f32 0.0, %v740
        %v742 = vpop.f32.mrb[0].mxu0
        %743 = vmatprep.mubr.bf16.mxu0 0
        %744 = vmatmul.mubr.bf16.gmra.mrb[0].mxu0 %v692
        %v745 = vpop.f32.mrb[0].mxu0
        %v746 = vadd.f32 0.0, %v745
        %v747 = vpop.f32.mrb[0].mxu0
        %v748 = vpop.f32.mrb[0].mxu0
        %v749 = vadd.f32 0.0, %v748
        %v750 = vpop.f32.mrb[0].mxu0
        %751 = vmatprep.mubr.bf16.mxu0 0
        %752 = vmatmul.mubr.bf16.gmra.mrb[0].mxu0 %v695
        %v753 = vpop.f32.mrb[0].mxu0
        %v754 = vadd.f32 0.0, %v753
        %v755 = vpop.f32.mrb[0].mxu0
        %v756 = vpop.f32.mrb[0].mxu0
        %v757 = vadd.f32 0.0, %v756
        %v758 = vpop.f32.mrb[0].mxu0
        %759 = vmatprep.mubr.bf16.mxu0 0
        %760 = vmatmul.mubr.bf16.gmra.mrb[0].mxu0 %v698
        %v761 = vpop.f32.mrb[0].mxu0
        %v762 = vadd.f32 0.0, %v761
        %v763 = vpop.f32.mrb[0].mxu0
        %v764 = vpop.f32.mrb[0].mxu0
        %v765 = vadd.f32 0.0, %v764
        %v766 = vpop.f32.mrb[0].mxu0
        %767 = vmatprep.mubr.bf16.mxu0 0
        %768 = vmatmul.mubr.bf16.gmra.mrb[0].mxu0 %v701
        %v769 = vpop.f32.mrb[0].mxu0
        %v770 = vadd.f32 0.0, %v769
        %v771 = vpop.f32.mrb[0].mxu0
        %v772 = vpop.f32.mrb[0].mxu0
        %v773 = vadd.f32 0.0, %v772
        %v774 = vpop.f32.mrb[0].mxu0
        %775 = vdwg.mxu0
        %v776 = vmax.f32 %v642, %v738
        %v777 = vmax.f32 %v643, %v741
        %v778 = vmax.f32 %v644, %v746
        %v779 = vmax.f32 %v645, %v749
        %v780 = vmax.f32 %v646, %v754
        %v781 = vmax.f32 %v647, %v757
        %v782 = vmax.f32 %v648, %v762
        %v783 = vmax.f32 %v649, %v765
        %v784 = vmax.f32 %v650, %v770
        %v785 = vmax.f32 %v651, %v773
        %s786 = scalar_lea.vmem %s343, 120 [#allocation2]
        %v787 = vld [vmem:[%s786] sm:$0xf]
        %v788 = vld [vmem:[%s786 + $0x4] sm:$0xf]
        %v789 = vld [vmem:[%s786 + $0x8] sm:$0xf]
        %v790 = vld [vmem:[%s786 + $0xc] sm:$0xf]
        %v791 = vld [vmem:[%s786 + $0x10] sm:$0xf]
        %v792 = vld [vmem:[%s786 + $0x14] sm:$0xf]
        %v793 = vld [vmem:[%s786 + $0x18] sm:$0xf]
        %v794 = vld [vmem:[%s786 + $0x1c] sm:$0xf]
        %v795 = vld [vmem:[%s786 + $0x20] sm:$0xf]
        %v796 = vld [vmem:[%s786 + $0x24] sm:$0xf]
        %v807 = vunpack.c.l.b16 %v787
        %v808 = vunpack.c.l.b16 %v788
        %v809 = vunpack.c.l.b16 %v789
        %v810 = vunpack.c.l.b16 %v790
        %v811 = vunpack.c.l.b16 %v791
        %v812 = vunpack.c.l.b16 %v792
        %v813 = vunpack.c.l.b16 %v793
        %v814 = vunpack.c.l.b16 %v794
        %v815 = vunpack.c.l.b16 %v795
        %v816 = vunpack.c.l.b16 %v796
        %v817 = vpack.c.b16 %v808, %v807
        %v818 = vpack.c.b16 %v810, %v809
        %v819 = vpack.c.b16 %v812, %v811
        %v820 = vpack.c.b16 %v814, %v813
        %v821 = vpack.c.b16 %v816, %v815
        %v823 = vsel %vm422, %v817, 0
        %v826 = vsel %vm422, %v818, 0
        %v829 = vsel %vm422, %v819, 0
        %v832 = vsel %vm422, %v820, 0
        %v835 = vsel %vm422, %v821, 0
        %837 = vmatprep.subr.bf16.mxu0 0
        %838 = vmatpush1.bf16.msra.mxu0 %v419
        %839 = vmatprep.subr.bf16.mxu0 0
        %840 = vmatpush1.bf16.msra.mxu0 %v443
        %841 = vmatprep.subr.bf16.mxu0 0
        %842 = vmatpush1.bf16.msra.mxu0 0
        %843 = vmatprep.subr.bf16.mxu0 0
        %844 = vmatpush1.bf16.msra.mxu0 0
        %845 = vmatprep.subr.bf16.mxu0 0
        %846 = vmatpush1.bf16.msra.mxu0 0
        %847 = vmatprep.subr.bf16.mxu0 0
        %848 = vmatpush1.bf16.msra.mxu0 0
        %849 = vmatprep.subr.bf16.mxu0 0
        %850 = vmatpush1.bf16.msra.mxu0 0
        %851 = vmatprep.subr.bf16.mxu0 0
        %852 = vmatpush1.bf16.msra.mxu0 0
        %853 = vmatprep.subr.bf16.mxu0 0
        %854 = vmatpush1.bf16.msra.mxu0 0
        %855 = vmatprep.subr.bf16.mxu0 0
        %856 = vmatpush1.bf16.msra.mxu0 0
        %857 = vmatprep.subr.bf16.mxu0 0
        %858 = vmatpush1.bf16.msra.mxu0 0
        %859 = vmatprep.subr.bf16.mxu0 0
        %860 = vmatpush1.bf16.msra.mxu0 0
        %861 = vmatprep.subr.bf16.mxu0 0
        %862 = vmatpush1.bf16.msra.mxu0 0
        %863 = vmatprep.subr.bf16.mxu0 0
        %864 = vmatpush1.bf16.msra.mxu0 0
        %865 = vmatprep.subr.bf16.mxu0 0
        %866 = vmatpush1.bf16.msra.mxu0 0
        %867 = vmatprep.subr.bf16.mxu0 0
        %868 = vmatpush1.bf16.msra.mxu0 0
        %869 = vmatprep.mubr.bf16.mxu0 0
        %870 = vmatmul.mubr.bf16.gmra.mrb[0].mxu0 %v823
        %v871 = vpop.f32.mrb[0].mxu0
        %v872 = vadd.f32 0.0, %v871
        %v873 = vpop.f32.mrb[0].mxu0
        %v874 = vpop.f32.mrb[0].mxu0
        %v875 = vadd.f32 0.0, %v874
        %v876 = vpop.f32.mrb[0].mxu0
        %877 = vmatprep.mubr.bf16.mxu0 0
        %878 = vmatmul.mubr.bf16.gmra.mrb[0].mxu0 %v826
        %v879 = vpop.f32.mrb[0].mxu0
        %v880 = vadd.f32 0.0, %v879
        %v881 = vpop.f32.mrb[0].mxu0
        %v882 = vpop.f32.mrb[0].mxu0
        %v883 = vadd.f32 0.0, %v882
        %v884 = vpop.f32.mrb[0].mxu0
        %885 = vmatprep.mubr.bf16.mxu0 0
        %886 = vmatmul.mubr.bf16.gmra.mrb[0].mxu0 %v829
        %v887 = vpop.f32.mrb[0].mxu0
        %v888 = vadd.f32 0.0, %v887
        %v889 = vpop.f32.mrb[0].mxu0
        %v890 = vpop.f32.mrb[0].mxu0
        %v891 = vadd.f32 0.0, %v890
        %v892 = vpop.f32.mrb[0].mxu0
        %893 = vmatprep.mubr.bf16.mxu0 0
        %894 = vmatmul.mubr.bf16.gmra.mrb[0].mxu0 %v832
        %v895 = vpop.f32.mrb[0].mxu0
        %v896 = vadd.f32 0.0, %v895
        %v897 = vpop.f32.mrb[0].mxu0
        %v898 = vpop.f32.mrb[0].mxu0
        %v899 = vadd.f32 0.0, %v898
        %v900 = vpop.f32.mrb[0].mxu0
        %901 = vmatprep.mubr.bf16.mxu0 0
        %902 = vmatmul.mubr.bf16.gmra.mrb[0].mxu0 %v835
        %v903 = vpop.f32.mrb[0].mxu0
        %v904 = vadd.f32 0.0, %v903
        %v905 = vpop.f32.mrb[0].mxu0
        %v906 = vpop.f32.mrb[0].mxu0
        %v907 = vadd.f32 0.0, %v906
        %v908 = vpop.f32.mrb[0].mxu0
        %909 = vdwg.mxu0
        %v910 = vmax.f32 %v776, %v872
        %v911 = vmax.f32 %v777, %v875
        %v912 = vmax.f32 %v778, %v880
        %v913 = vmax.f32 %v779, %v883
        %v914 = vmax.f32 %v780, %v888
        %v915 = vmax.f32 %v781, %v891
        %v916 = vmax.f32 %v782, %v896
        %v917 = vmax.f32 %v783, %v899
        %v918 = vmax.f32 %v784, %v904
        %v919 = vmax.f32 %v785, %v907
        %v920 = vld [vmem:[%s2] sm:$0x1]
        %v922 = vlaneseq
        %v923 = vshrl.u32 %v922, 7
        %v924 = vsub.s32 0, %v923
        %v925 = vrot.slane %v920, %v924
        %v927 = vadd.f32 %v910, %v925
        %v928 = vadd.f32 %v911, %v925
        %v929 = vadd.f32 %v912, %v925
        %v930 = vadd.f32 %v913, %v925
        %v931 = vadd.f32 %v914, %v925
        %v932 = vadd.f32 %v915, %v925
        %v933 = vadd.f32 %v916, %v925
        %v934 = vadd.f32 %v917, %v925
        %v935 = vadd.f32 %v918, %v925
        %v936 = vadd.f32 %v919, %v925
        %v937 = vmax.f32 %v927, 0.0
        %v938 = vmax.f32 %v928, 0.0
        %v939 = vmax.f32 %v929, 0.0
        %v940 = vmax.f32 %v930, 0.0
        %v941 = vmax.f32 %v931, 0.0
        %v942 = vmax.f32 %v932, 0.0
        %v943 = vmax.f32 %v933, 0.0
        %v944 = vmax.f32 %v934, 0.0
        %v945 = vmax.f32 %v935, 0.0
        %v946 = vmax.f32 %v936, 0.0
        %v947 = vpack.c.bf16 %v938, %v937
        %v948 = vpack.c.bf16 %v940, %v939
        %v949 = vpack.c.bf16 %v942, %v941
        %v950 = vpack.c.bf16 %v944, %v943
        %v951 = vpack.c.bf16 %v946, %v945
        %v957 = vunpack.c.l.b16 %v947
        %v958 = vunpack.c.h.b16 %v947
        %v959 = vunpack.c.l.b16 %v948
        %v960 = vunpack.c.h.b16 %v948
        %v961 = vunpack.c.l.b16 %v949
        %v962 = vunpack.c.h.b16 %v949
        %v963 = vunpack.c.l.b16 %v950
        %v964 = vunpack.c.h.b16 %v950
        %v965 = vunpack.c.l.b16 %v951
        %v966 = vunpack.c.h.b16 %v951
        %v967 = vpack.c.b16 %v957, %v957
        %v968 = vpack.c.b16 %v958, %v958
        %v969 = vpack.c.b16 %v959, %v959
        %v970 = vpack.c.b16 %v960, %v960
        %v971 = vpack.c.b16 %v961, %v961
        %v972 = vpack.c.b16 %v962, %v962
        %v973 = vpack.c.b16 %v963, %v963
        %v974 = vpack.c.b16 %v964, %v964
        %v975 = vpack.c.b16 %v965, %v965
        %v976 = vpack.c.b16 %v966, %v966
        %987 = vst [vmem:[%s369] sm:$0xf] %v967
        %988 = vst [vmem:[%s369 + $0x4] sm:$0xf] %v968
        %989 = vst [vmem:[%s369 + $0x8] sm:$0xf] %v969
        %990 = vst [vmem:[%s369 + $0xc] sm:$0xf] %v970
        %991 = vst [vmem:[%s369 + $0x10] sm:$0xf] %v971
        %992 = vst [vmem:[%s369 + $0x14] sm:$0xf] %v972
        %993 = vst [vmem:[%s369 + $0x18] sm:$0xf] %v973
        %994 = vst [vmem:[%s369 + $0x1c] sm:$0xf] %v974
        %995 = vst [vmem:[%s369 + $0x20] sm:$0xf] %v975
        %996 = vst [vmem:[%s369 + $0x24] sm:$0xf] %v976
        %s997 = smul.u32 10, %s14
        %p998 = scmp.lt.s32.totalorder %s997, 39
        %s999 = scalar_select %p998, %s997, 39
        %s1000 = smul.addr %s999, 4
        %s1001 = scalar_lea.vmem %s3, %s1000
        // Predicated region
        $region74: #{forward.3} parent=68 // pred_check
          %p1002 = pneg %p100
        $region75: #{forward.3} parent=68 // pred_check_branch
          %1004 = sbr.rel (%p1002) target = $region77
        $region76: #{forward.3} parent=68 // pred_region
          %s1005 = smul.u32 10, %s14
        $region77: #{forward.3} parent=68 // pred_fallthru
          _
      $region69: #{forward.3} parent=5 // pred_fallthru
        _
      %p1006 = scmp.le.s32.totalorder 2, %s9
      // Predicated region
      $region78: #{forward.3} parent=5 // pred_check
        %p1007 = pneg %p1006
      $region79: #{forward.3} parent=5 // pred_check_branch
        %1009 = sbr.rel (%p1007) target = $region81
      $region80: #{forward.3} parent=5 // pred_region
        %s1010 = ssub.s32 %s9, 2
        // Predicated region
        $region82: #{forward.3} parent=80 // pred_check
          %p1011 = pneg %p106
        $region83: #{forward.3} parent=80 // pred_check_branch
          %1013 = sbr.rel (%p1011) target = $region85
        $region84: #{forward.3} parent=80 // pred_region
          %s1014 = smul.u32 10, %s15
          %p1015 = scmp.lt.s32.totalorder %s1014, 39
          %s1016 = scalar_select %p1015, %s1014, 39
          %s1017 = smul.addr %s1016, 4
          %s1018 = scalar_lea.vmem %s3, %s1017
        $region85: #{forward.3} parent=80 // pred_fallthru
          _
      $region81: #{forward.3} parent=5 // pred_fallthru
        _
    $region6: #{forward.3} parent=1 // loop_footer
      %s13 = sadd.s32 1, %s9
    $region7: #{forward.3} parent=1 // loop_footer_branch
      %8 = sbr.rel target = $region3
    $region8: #{forward.3} parent=1 // loop_exit
      _

// kernel: forward.4
$region0: #{forward.4}
  #allocation0 [shape = 'u32[]', space=smem, size = 0x4, offset = 0x4, fixed_abs, tag = 'smem constant byte address 0x4 - core index']
  #allocation1 [shape = 'u32[144,128]{1,0:T(1,128)}', space=vmem, size = 0x12000, scoped, tag = 'internal scratch']
  %s0 = inlined_call_operand.vmem [shape: bf16[4,32,125], index: 0, kind: input, shape index: {}]
  %s1 = inlined_call_operand.vmem [shape: bf16[125,128], index: 1, kind: input, shape index: {}]
  %s2 = inlined_call_operand.vmem [shape: f32[1,128], index: 2, kind: input, shape index: {}]
  %s3 = inlined_call_operand.vmem [shape: bf16[32,128], index: 3, kind: output, shape index: {}]
  %s4 = sld [smem:[#allocation0]]
  $region86: #{forward.4} parent=0
    _
  %s6 = ssub.s32 1, %s4
  %s7 = scalar_select 0, %s6, %s4
  $region1: #{forward.4} parent=0
    #allocation2 [shape = 'u8[32768]{0}', space=vmem, size = 0x8000, scoped, tag = 'input window, operand 0']
    loop: start=0, step=1, limit=4
    $region2: #{forward.4} parent=1 // loop_pre_header
      _
    $region3: #{forward.4} parent=1 // loop_header
      %s9 = sphi 0, %s13
      %p10 = scmp.ge.s32.totalorder %s9, 4
      %s19 = sphi 0, %s21
      %s22 = sphi 0, %s19
      %s23 = sphi 0, %s22
      %s39 = sphi 0, %s23
      %s43 = sphi 0, %s43
      %s45 = sphi 0, %s43
      %s46 = sphi 0, %s45
      %s60 = sphi 0, %s46
      %s64 = sphi 0, %s64
      %s66 = sphi 0, %s64
      %s67 = sphi 0, %s66
      %s81 = sphi 0, %s67
      %s87 = sphi 0, %s89
      %s90 = sphi 0, %s87
      %s91 = sphi 0, %s90
      %s107 = sphi 0, %s91
    $region4: #{forward.4} parent=1 // loop_header_branch
      %12 = sbr.rel (%p10) target = $region8
    $region5: #{forward.4} parent=1 // loop_body
      %s14 = ssub.s32 %s9, 1
      %s15 = ssub.s32 %s9, 2
      %s16 = sadd.s32 %s9, 1
      %s17 = ssub.s32 %s9, %s16
      %p18 = scmp.eq.s32.totalorder %s17, 0
      %s20 = sadd.s32 %s19, 1
      %s21 = scalar_select %p18, %s19, %s20
      %p24 = pneg %p18
      %p25 = scmp.eq.s32.totalorder %s9, 1
      %p26 = por %p24, %p25
      %p27 = scmp.ne.s32.totalorder %s19, %s22
      %p28 = scmp.eq.s32.totalorder %s9, 0
      %p29 = por %p27, %p28
      %p30 = scmp.ne.s32.totalorder %s19, %s22
      %p31 = scmp.eq.s32.totalorder %s14, 1
      %p32 = por %p30, %p31
      %p33 = scmp.ne.s32.totalorder %s22, %s23
      %p34 = scmp.eq.s32.totalorder %s14, 0
      %p35 = por %p33, %p34
      %p36 = scmp.ne.s32.totalorder %s22, %s23
      %p37 = scmp.eq.s32.totalorder %s15, 1
      %p38 = por %p36, %p37
      %p40 = scmp.ne.s32.totalorder %s23, %s39
      %p41 = scmp.eq.s32.totalorder %s15, 0
      %p42 = por %p40, %p41
      %s44 = sadd.s32 %s43, 1
      %p47 = scmp.eq.s32.totalorder %s9, 1
      %p48 = scmp.ne.s32.totalorder %s43, %s45
      %p49 = scmp.eq.s32.totalorder %s9, 0
      %p50 = por %p48, %p49
      %p51 = scmp.ne.s32.totalorder %s43, %s45
      %p52 = scmp.eq.s32.totalorder %s14, 1
      %p53 = por %p51, %p52
      %p54 = scmp.ne.s32.totalorder %s45, %s46
      %p55 = scmp.eq.s32.totalorder %s14, 0
      %p56 = por %p54, %p55
      %p57 = scmp.ne.s32.totalorder %s45, %s46
      %p58 = scmp.eq.s32.totalorder %s15, 1
      %p59 = por %p57, %p58
      %p61 = scmp.ne.s32.totalorder %s46, %s60
      %p62 = scmp.eq.s32.totalorder %s15, 0
      %p63 = por %p61, %p62
      %s65 = sadd.s32 %s64, 1
      %p68 = scmp.eq.s32.totalorder %s9, 1
      %p69 = scmp.ne.s32.totalorder %s64, %s66
      %p70 = scmp.eq.s32.totalorder %s9, 0
      %p71 = por %p69, %p70
      %p72 = scmp.ne.s32.totalorder %s64, %s66
      %p73 = scmp.eq.s32.totalorder %s14, 1
      %p74 = por %p72, %p73
      %p75 = scmp.ne.s32.totalorder %s66, %s67
      %p76 = scmp.eq.s32.totalorder %s14, 0
      %p77 = por %p75, %p76
      %p78 = scmp.ne.s32.totalorder %s66, %s67
      %p79 = scmp.eq.s32.totalorder %s15, 1
      %p80 = por %p78, %p79
      %p82 = scmp.ne.s32.totalorder %s67, %s81
      %p83 = scmp.eq.s32.totalorder %s15, 0
      %p84 = por %p82, %p83
      %s85 = ssub.s32 %s9, %s16
      %p86 = scmp.eq.s32.totalorder %s85, 0
      %s88 = sadd.s32 %s87, 1
      %s89 = scalar_select %p86, %s87, %s88
      %p92 = pneg %p86
      %p93 = scmp.eq.s32.totalorder %s9, 1
      %p94 = por %p92, %p93
      %p95 = scmp.ne.s32.totalorder %s87, %s90
      %p96 = scmp.eq.s32.totalorder %s9, 0
      %p97 = por %p95, %p96
      %p98 = scmp.ne.s32.totalorder %s87, %s90
      %p99 = scmp.eq.s32.totalorder %s14, 1
      %p100 = por %p98, %p99
      %p101 = scmp.ne.s32.totalorder %s90, %s91
      %p102 = scmp.eq.s32.totalorder %s14, 0
      %p103 = por %p101, %p102
      %p104 = scmp.ne.s32.totalorder %s90, %s91
      %p105 = scmp.eq.s32.totalorder %s15, 1
      %p106 = por %p104, %p105
      %p108 = scmp.ne.s32.totalorder %s91, %s107
      %p109 = scmp.eq.s32.totalorder %s15, 0
      %p110 = por %p108, %p109
      %p111 = scmp.le.s32.totalorder 1, %s9
      %p112 = scmp.lt.s32.totalorder %s9, 3
      %p113 = pnand %p111, %p112
      %p114 = pneg %p113
      // Predicated region
      $region9: #{forward.4} parent=5 // pred_check
        _
      $region10: #{forward.4} parent=5 // pred_check_branch
        %116 = sbr.rel (%p113) target = $region12
      $region11: #{forward.4} parent=5 // pred_region
        %s117 = ssub.s32 %s9, 1
        // Predicated region
        $region13: #{forward.4} parent=11 // pred_check
          %p118 = pneg %p56
        $region14: #{forward.4} parent=11 // pred_check_branch
          %120 = sbr.rel (%p118) target = $region16
        $region15: #{forward.4} parent=11 // pred_region
          _
        $region16: #{forward.4} parent=11 // pred_fallthru
          _
        // Predicated region
        $region17: #{forward.4} parent=11 // pred_check
          %p121 = pneg %p77
        $region18: #{forward.4} parent=11 // pred_check_branch
          %123 = sbr.rel (%p121) target = $region20
        $region19: #{forward.4} parent=11 // pred_region
          _
        $region20: #{forward.4} parent=11 // pred_fallthru
          _
      $region12: #{forward.4} parent=5 // pred_fallthru
        _
      %p124 = scmp.lt.s32.totalorder %s9, 2
      // Predicated region
      $region21: #{forward.4} parent=5 // pred_check
        %p125 = pneg %p124
      $region22: #{forward.4} parent=5 // pred_check_branch
        %127 = sbr.rel (%p125) target = $region24
      $region23: #{forward.4} parent=5 // pred_region
        // Predicated region
        $region25: #{forward.4} parent=23 // pred_check
          %p128 = pneg %p29
        $region26: #{forward.4} parent=23 // pred_check_branch
          %130 = sbr.rel (%p128) target = $region28
        $region27: #{forward.4} parent=23 // pred_region
          %s131 = sand.u32 %s19, 1
          %s132 = sand.u32 %s19, 1
          %s133 = smul.addr %s132, 32
          %s134 = scalar_lea.vmem [#allocation2], %s133
          %s135 = smul.u32 2, %s9
          %s136 = smul.addr %s135, 4
          %s137 = scalar_lea.vmem %s0, %s136
          // Predicated region
          $region29: #{forward.4} parent=27 // pred_check
            _
          $region30: #{forward.4} parent=27 // pred_check_branch
            %139 = sbr.rel (0) target = $region32
          $region31: #{forward.4} parent=27 // pred_region
            // Predicated region
            $region33: #{forward.4} parent=31 // pred_check
              _
            $region34: #{forward.4} parent=31 // pred_check_branch
              %141 = sbr.rel target = $region36
            $region35: #{forward.4} parent=31 // pred_region
              // Predicated region
              $region48: #{forward.4} parent=35 // pred_check
                _
              $region49: #{forward.4} parent=35 // pred_check_branch
                %170 = sbr.rel (0) target = $region51
              $region50: #{forward.4} parent=35 // pred_region
                loop: start=0, step=1, limit=1
                $region52: #{forward.4} parent=50 // loop_pre_header
                  _
                $region53: #{forward.4} parent=50 // loop_header
                  %s172 = sphi 0, %s176
                  %p173 = scmp.ge.s32.totalorder %s172, 1
                  %s177 = sphi %s137, %s137
                  %s178 = sphi %s134, %s134
                $region54: #{forward.4} parent=50 // loop_header_branch
                  %175 = sbr.rel (%p173) target = $region58
                $region55: #{forward.4} parent=50 // loop_body
                  _
                $region56: #{forward.4} parent=50 // loop_footer
                  %s176 = sadd.s32 1, %s172
                $region57: #{forward.4} parent=50 // loop_footer_branch
                  %171 = sbr.rel target = $region53
                $region58: #{forward.4} parent=50 // loop_exit
                  _
                loop: start=0, step=1, limit=1
                $region59: #{forward.4} parent=50 // loop_pre_header
                  _
                $region60: #{forward.4} parent=50 // loop_header
                  %s181 = sphi 0, %s185
                  %p182 = scmp.ge.s32.totalorder %s181, 1
                  %s186 = sphi %s137, %s137
                  %s187 = sphi %s134, %s134
                $region61: #{forward.4} parent=50 // loop_header_branch
                  %184 = sbr.rel (%p182) target = $region65
                $region62: #{forward.4} parent=50 // loop_body
                  %v188 = vld [vmem:[%s186] sm:$0xf]
                  %189 = vst [vmem:[%s187] sm:$0xf] %v188
                  %v190 = vld [vmem:[%s186 + $0x4] sm:$0xf]
                  %191 = vst [vmem:[%s187 + $0x4] sm:$0xf] %v190
                  %v192 = vld [vmem:[%s186 + $0x10] sm:$0xf]
                  %193 = vst [vmem:[%s187 + $0x8] sm:$0xf] %v192
                  %v194 = vld [vmem:[%s186 + $0x14] sm:$0xf]
                  %195 = vst [vmem:[%s187 + $0xc] sm:$0xf] %v194
                  %v196 = vld [vmem:[%s186 + $0x20] sm:$0xf]
                  %197 = vst [vmem:[%s187 + $0x10] sm:$0xf] %v196
                  %v198 = vld [vmem:[%s186 + $0x24] sm:$0xf]
                  %199 = vst [vmem:[%s187 + $0x14] sm:$0xf] %v198
                  %v200 = vld [vmem:[%s186 + $0x30] sm:$0xf]
                  %201 = vst [vmem:[%s187 + $0x18] sm:$0xf] %v200
                  %v202 = vld [vmem:[%s186 + $0x34] sm:$0xf]
                  %203 = vst [vmem:[%s187 + $0x1c] sm:$0xf] %v202
                $region63: #{forward.4} parent=50 // loop_footer
                  %s185 = sadd.s32 1, %s181
                $region64: #{forward.4} parent=50 // loop_footer_branch
                  %180 = sbr.rel target = $region60
                $region65: #{forward.4} parent=50 // loop_exit
                  _
              $region51: #{forward.4} parent=35 // pred_fallthru
                _
            $region36: #{forward.4} parent=31 // pred_fallthru
              _
            // Predicated region
            $region37: #{forward.4} parent=31 // pred_check
              _
            $region38: #{forward.4} parent=31 // pred_check_branch
              %143 = sbr.rel (0) target = $region40
            $region39: #{forward.4} parent=31 // pred_region
              loop: start=0, step=1, limit=1
              $region41: #{forward.4} parent=39 // loop_pre_header
                _
              $region42: #{forward.4} parent=39 // loop_header
                %s146 = sphi 0, %s150
                %p147 = scmp.ge.s32.totalorder %s146, 1
                %s151 = sphi %s137, %s137
                %s152 = sphi %s134, %s134
              $region43: #{forward.4} parent=39 // loop_header_branch
                %149 = sbr.rel (%p147) target = $region47
              $region44: #{forward.4} parent=39 // loop_body
                %v153 = vld [vmem:[%s151] sm:$0xf]
                %154 = vst [vmem:[%s152] sm:$0xf] %v153
                %v155 = vld [vmem:[%s151 + $0x4] sm:$0xf]
                %156 = vst [vmem:[%s152 + $0x4] sm:$0xf] %v155
                %v157 = vld [vmem:[%s151 + $0x10] sm:$0xf]
                %158 = vst [vmem:[%s152 + $0x8] sm:$0xf] %v157
                %v159 = vld [vmem:[%s151 + $0x14] sm:$0xf]
                %160 = vst [vmem:[%s152 + $0xc] sm:$0xf] %v159
                %v161 = vld [vmem:[%s151 + $0x20] sm:$0xf]
                %162 = vst [vmem:[%s152 + $0x10] sm:$0xf] %v161
                %v163 = vld [vmem:[%s151 + $0x24] sm:$0xf]
                %164 = vst [vmem:[%s152 + $0x14] sm:$0xf] %v163
                %v165 = vld [vmem:[%s151 + $0x30] sm:$0xf]
                %166 = vst [vmem:[%s152 + $0x18] sm:$0xf] %v165
                %v167 = vld [vmem:[%s151 + $0x34] sm:$0xf]
                %168 = vst [vmem:[%s152 + $0x1c] sm:$0xf] %v167
              $region45: #{forward.4} parent=39 // loop_footer
                %s150 = sadd.s32 1, %s146
              $region46: #{forward.4} parent=39 // loop_footer_branch
                %145 = sbr.rel target = $region42
              $region47: #{forward.4} parent=39 // loop_exit
                _
            $region40: #{forward.4} parent=31 // pred_fallthru
              _
          $region32: #{forward.4} parent=27 // pred_fallthru
            _
          %204 = vnop
        $region28: #{forward.4} parent=23 // pred_fallthru
          _
      $region24: #{forward.4} parent=5 // pred_fallthru
        _
      %p205 = scmp.le.s32.totalorder 1, %s9
      %p206 = scmp.lt.s32.totalorder %s9, 3
      %p207 = pnand %p205, %p206
      %p208 = pneg %p207
      // Predicated region
      $region66: #{forward.4} parent=5 // pred_check
        _
      $region67: #{forward.4} parent=5 // pred_check_branch
        %210 = sbr.rel (%p207) target = $region69
      $region68: #{forward.4} parent=5 // pred_region
        %s211 = ssub.s32 %s9, 1
        %s212 = sand.u32 %s22, 1
        %s213 = sand.u32 %s22, 1
        %s214 = smul.addr %s213, 32
        %s215 = scalar_lea.vmem [#allocation2], %s214
        // Predicated region
        $region70: #{forward.4} parent=68 // pred_check
          %p216 = pneg %p35
        $region71: #{forward.4} parent=68 // pred_check_branch
          %218 = sbr.rel (%p216) target = $region73
        $region72: #{forward.4} parent=68 // pred_region
          _
        $region73: #{forward.4} parent=68 // pred_fallthru
          _
        %s219 = sand.u32 %s22, 1
        %s220 = sand.u32 %s22, 1
        %s221 = smul.addr %s220, 32
        %s222 = scalar_lea.vmem [#allocation2], %s221
        %p223 = pneg %p35
        %p224 = pneg %p32
        %p225 = pneg %p56
        %p226 = pneg %p53
        %p227 = pneg %p77
        %p228 = pneg %p74
        %p229 = pneg %p103
        %p230 = pneg %p100
        %s231 = smul.u32 2, %s14
        %p232 = scmp.lt.s32.totalorder %s231, 3
        %s233 = scalar_select %p232, %s231, 3
        %s234 = smul.addr %s233, 4
        %s235 = scalar_lea.vmem %s3, %s234
        %s236 = smul.u32 2, %s14
        %s237 = smul.u32 2, %s14
        %p238 = scmp.lt.s32.totalorder %s237, 3
        %s239 = scalar_select %p238, %s237, 3
        %s240 = smul.addr %s239, 4
        %s241 = scalar_lea.vmem %s3, %s240
        %s242 = smul.u32 2, %s14
        %v244 = vld [vmem:[%s1] sm:$0xf]
        %v245 = vld [vmem:[%s1 + $0x4] sm:$0xf]
        %v246 = vld [vmem:[%s1 + $0x8] sm:$0xf]
        %v247 = vld [vmem:[%s1 + $0xc] sm:$0xf]
        %v248 = vld [vmem:[%s1 + $0x10] sm:$0xf]
        %v249 = vld [vmem:[%s1 + $0x14] sm:$0xf]
        %v250 = vld [vmem:[%s1 + $0x18] sm:$0xf]
        %v251 = vld [vmem:[%s1 + $0x1c] sm:$0xf]
        %v252 = vld [vmem:[%s1 + $0x20] sm:$0xf]
        %v253 = vld [vmem:[%s1 + $0x24] sm:$0xf]
        %v254 = vld [vmem:[%s1 + $0x28] sm:$0xf]
        %v255 = vld [vmem:[%s1 + $0x2c] sm:$0xf]
        %v256 = vld [vmem:[%s1 + $0x30] sm:$0xf]
        %v257 = vld [vmem:[%s1 + $0x34] sm:$0xf]
        %v258 = vld [vmem:[%s1 + $0x38] sm:$0xf]
        %v259 = vld [vmem:[%s1 + $0x3c] sm:$0x7]
        %v260 = vld [vmem:[%s215] sm:$0xf]
        %v261 = vld [vmem:[%s215 + $0x4] sm:$0xf]
        %v264 = vunpack.c.l.b16 %v260
        %v265 = vunpack.c.l.b16 %v261
        %v266 = vpack.c.b16 %v265, %v264
        %v283 = vunpack.c.l.b16 %v244
        %v284 = vunpack.c.l.b16 %v245
        %v285 = vunpack.c.l.b16 %v246
        %v286 = vunpack.c.l.b16 %v247
        %v287 = vunpack.c.l.b16 %v248
        %v288 = vunpack.c.l.b16 %v249
        %v289 = vunpack.c.l.b16 %v250
        %v290 = vunpack.c.l.b16 %v251
        %v291 = vunpack.c.l.b16 %v252
        %v292 = vunpack.c.l.b16 %v253
        %v293 = vunpack.c.l.b16 %v254
        %v294 = vunpack.c.l.b16 %v255
        %v295 = vunpack.c.l.b16 %v256
        %v296 = vunpack.c.l.b16 %v257
        %v297 = vunpack.c.l.b16 %v258
        %v298 = vunpack.c.l.b16 %v259
        %v299 = vpack.c.b16 %v284, %v283
        %v300 = vpack.c.b16 %v286, %v285
        %v301 = vpack.c.b16 %v288, %v287
        %v302 = vpack.c.b16 %v290, %v289
        %v303 = vpack.c.b16 %v292, %v291
        %v304 = vpack.c.b16 %v294, %v293
        %v305 = vpack.c.b16 %v296, %v295
        %v306 = vpack.c.b16 %v298, %v297
        %vm314 = vcmask 1022976
        %v316 = vsel %vm314, %v266, 0
        %vm318 = vcmask 1045504
        %vm319 = vcmask 1046528
        %v320 = vsel %vm318, 4294967295, 65535
        %v321 = vsel %vm319, %v320, 0
        %v323 = vand.u32 %v306, %v321
        %325 = vmatprep.subr.bf16.mxu0 0
        %326 = vmatpush1.bf16.msra.mxu0 %v299
        %327 = vmatprep.subr.bf16.mxu0 0
        %328 = vmatpush1.bf16.msra.mxu0 %v300
        %329 = vmatprep.subr.bf16.mxu0 0
        %330 = vmatpush1.bf16.msra.mxu0 %v301
        %331 = vmatprep.subr.bf16.mxu0 0
        %332 = vmatpush1.bf16.msra.mxu0 %v302
        %333 = vmatprep.subr.bf16.mxu0 0
        %334 = vmatpush1.bf16.msra.mxu0 %v303
        %335 = vmatprep.subr.bf16.mxu0 0
        %336 = vmatpush1.bf16.msra.mxu0 %v304
        %337 = vmatprep.subr.bf16.mxu0 0
        %338 = vmatpush1.bf16.msra.mxu0 %v305
        %339 = vmatprep.subr.bf16.mxu0 0
        %340 = vmatpush1.bf16.msra.mxu0 %v323
        %341 = vmatprep.subr.bf16.mxu0 0
        %342 = vmatpush1.bf16.msra.mxu0 0
        %343 = vmatprep.subr.bf16.mxu0 0
        %344 = vmatpush1.bf16.msra.mxu0 0
        %345 = vmatprep.subr.bf16.mxu0 0
        %346 = vmatpush1.bf16.msra.mxu0 0
        %347 = vmatprep.subr.bf16.mxu0 0
        %348 = vmatpush1.bf16.msra.mxu0 0
        %349 = vmatprep.subr.bf16.mxu0 0
        %350 = vmatpush1.bf16.msra.mxu0 0
        %351 = vmatprep.subr.bf16.mxu0 0
        %352 = vmatpush1.bf16.msra.mxu0 0
        %353 = vmatprep.subr.bf16.mxu0 0
        %354 = vmatpush1.bf16.msra.mxu0 0
        %355 = vmatprep.subr.bf16.mxu0 0
        %356 = vmatpush1.bf16.msra.mxu0 0
        %357 = vmatprep.mubr.bf16.mxu0 0
        %358 = vmatmul.mubr.bf16.gmra.mrb[0].mxu0 %v316
        %v359 = vpop.f32.mrb[0].mxu0
        %v360 = vadd.f32 0.0, %v359
        %v361 = vpop.f32.mrb[0].mxu0
        %v362 = vpop.f32.mrb[0].mxu0
        %v363 = vadd.f32 0.0, %v362
        %v364 = vpop.f32.mrb[0].mxu0
        %365 = vdwg.mxu0
        %s366 = scalar_lea.vmem %s215, 8 [#allocation2]
        %v367 = vld [vmem:[%s366] sm:$0xf]
        %v368 = vld [vmem:[%s366 + $0x4] sm:$0xf]
        %v371 = vunpack.c.l.b16 %v367
        %v372 = vunpack.c.l.b16 %v368
        %v373 = vpack.c.b16 %v372, %v371
        %v375 = vsel %vm314, %v373, 0
        %377 = vmatprep.subr.bf16.mxu0 0
        %378 = vmatpush1.bf16.msra.mxu0 %v299
        %379 = vmatprep.subr.bf16.mxu0 0
        %380 = vmatpush1.bf16.msra.mxu0 %v300
        %381 = vmatprep.subr.bf16.mxu0 0
        %382 = vmatpush1.bf16.msra.mxu0 %v301
        %383 = vmatprep.subr.bf16.mxu0 0
        %384 = vmatpush1.bf16.msra.mxu0 %v302
        %385 = vmatprep.subr.bf16.mxu0 0
        %386 = vmatpush1.bf16.msra.mxu0 %v303
        %387 = vmatprep.subr.bf16.mxu0 0
        %388 = vmatpush1.bf16.msra.mxu0 %v304
        %389 = vmatprep.subr.bf16.mxu0 0
        %390 = vmatpush1.bf16.msra.mxu0 %v305
        %391 = vmatprep.subr.bf16.mxu0 0
        %392 = vmatpush1.bf16.msra.mxu0 %v323
        %393 = vmatprep.subr.bf16.mxu0 0
        %394 = vmatpush1.bf16.msra.mxu0 0
        %395 = vmatprep.subr.bf16.mxu0 0
        %396 = vmatpush1.bf16.msra.mxu0 0
        %397 = vmatprep.subr.bf16.mxu0 0
        %398 = vmatpush1.bf16.msra.mxu0 0
        %399 = vmatprep.subr.bf16.mxu0 0
        %400 = vmatpush1.bf16.msra.mxu0 0
        %401 = vmatprep.subr.bf16.mxu0 0
        %402 = vmatpush1.bf16.msra.mxu0 0
        %403 = vmatprep.subr.bf16.mxu0 0
        %404 = vmatpush1.bf16.msra.mxu0 0
        %405 = vmatprep.subr.bf16.mxu0 0
        %406 = vmatpush1.bf16.msra.mxu0 0
        %407 = vmatprep.subr.bf16.mxu0 0
        %408 = vmatpush1.bf16.msra.mxu0 0
        %409 = vmatprep.mubr.bf16.mxu0 0
        %410 = vmatmul.mubr.bf16.gmra.mrb[0].mxu0 %v375
        %v411 = vpop.f32.mrb[0].mxu0
        %v412 = vadd.f32 0.0, %v411
        %v413 = vpop.f32.mrb[0].mxu0
        %v414 = vpop.f32.mrb[0].mxu0
        %v415 = vadd.f32 0.0, %v414
        %v416 = vpop.f32.mrb[0].mxu0
        %417 = vdwg.mxu0
        %v418 = vmax.f32 %v360, %v412
        %v419 = vmax.f32 %v363, %v415
        %s420 = scalar_lea.vmem %s215, 16 [#allocation2]
        %v421 = vld [vmem:[%s420] sm:$0xf]
        %v422 = vld [vmem:[%s420 + $0x4] sm:$0xf]
        %v425 = vunpack.c.l.b16 %v421
        %v426 = vunpack.c.l.b16 %v422
        %v427 = vpack.c.b16 %v426, %v425
        %v429 = vsel %vm314, %v427, 0
        %431 = vmatprep.subr.bf16.mxu0 0
        %432 = vmatpush1.bf16.msra.mxu0 %v299
        %433 = vmatprep.subr.bf16.mxu0 0
        %434 = vmatpush1.bf16.msra.mxu0 %v300
        %435 = vmatprep.subr.bf16.mxu0 0
        %436 = vmatpush1.bf16.msra.mxu0 %v301
        %437 = vmatprep.subr.bf16.mxu0 0
        %438 = vmatpush1.bf16.msra.mxu0 %v302
        %439 = vmatprep.subr.bf16.mxu0 0
        %440 = vmatpush1.bf16.msra.mxu0 %v303
        %441 = vmatprep.subr.bf16.mxu0 0
        %442 = vmatpush1.bf16.msra.mxu0 %v304
        %443 = vmatprep.subr.bf16.mxu0 0
        %444 = vmatpush1.bf16.msra.mxu0 %v305
        %445 = vmatprep.subr.bf16.mxu0 0
        %446 = vmatpush1.bf16.msra.mxu0 %v323
        %447 = vmatprep.subr.bf16.mxu0 0
        %448 = vmatpush1.bf16.msra.mxu0 0
        %449 = vmatprep.subr.bf16.mxu0 0
        %450 = vmatpush1.bf16.msra.mxu0 0
        %451 = vmatprep.subr.bf16.mxu0 0
        %452 = vmatpush1.bf16.msra.mxu0 0
        %453 = vmatprep.subr.bf16.mxu0 0
        %454 = vmatpush1.bf16.msra.mxu0 0
        %455 = vmatprep.subr.bf16.mxu0 0
        %456 = vmatpush1.bf16.msra.mxu0 0
        %457 = vmatprep.subr.bf16.mxu0 0
        %458 = vmatpush1.bf16.msra.mxu0 0
        %459 = vmatprep.subr.bf16.mxu0 0
        %460 = vmatpush1.bf16.msra.mxu0 0
        %461 = vmatprep.subr.bf16.mxu0 0
        %462 = vmatpush1.bf16.msra.mxu0 0
        %463 = vmatprep.mubr.bf16.mxu0 0
        %464 = vmatmul.mubr.bf16.gmra.mrb[0].mxu0 %v429
        %v465 = vpop.f32.mrb[0].mxu0
        %v466 = vadd.f32 0.0, %v465
        %v467 = vpop.f32.mrb[0].mxu0
        %v468 = vpop.f32.mrb[0].mxu0
        %v469 = vadd.f32 0.0, %v468
        %v470 = vpop.f32.mrb[0].mxu0
        %471 = vdwg.mxu0
        %v472 = vmax.f32 %v418, %v466
        %v473 = vmax.f32 %v419, %v469
        %s474 = scalar_lea.vmem %s215, 24 [#allocation2]
        %v475 = vld [vmem:[%s474] sm:$0xf]
        %v476 = vld [vmem:[%s474 + $0x4] sm:$0xf]
        %v479 = vunpack.c.l.b16 %v475
        %v480 = vunpack.c.l.b16 %v476
        %v481 = vpack.c.b16 %v480, %v479
        %v483 = vsel %vm314, %v481, 0
        %485 = vmatprep.subr.bf16.mxu0 0
        %486 = vmatpush1.bf16.msra.mxu0 %v299
        %487 = vmatprep.subr.bf16.mxu0 0
        %488 = vmatpush1.bf16.msra.mxu0 %v300
        %489 = vmatprep.subr.bf16.mxu0 0
        %490 = vmatpush1.bf16.msra.mxu0 %v301
        %491 = vmatprep.subr.bf16.mxu0 0
        %492 = vmatpush1.bf16.msra.mxu0 %v302
        %493 = vmatprep.subr.bf16.mxu0 0
        %494 = vmatpush1.bf16.msra.mxu0 %v303
        %495 = vmatprep.subr.bf16.mxu0 0
        %496 = vmatpush1.bf16.msra.mxu0 %v304
        %497 = vmatprep.subr.bf16.mxu0 0
        %498 = vmatpush1.bf16.msra.mxu0 %v305
        %499 = vmatprep.subr.bf16.mxu0 0
        %500 = vmatpush1.bf16.msra.mxu0 %v323
        %501 = vmatprep.subr.bf16.mxu0 0
        %502 = vmatpush1.bf16.msra.mxu0 0
        %503 = vmatprep.subr.bf16.mxu0 0
        %504 = vmatpush1.bf16.msra.mxu0 0
        %505 = vmatprep.subr.bf16.mxu0 0
        %506 = vmatpush1.bf16.msra.mxu0 0
        %507 = vmatprep.subr.bf16.mxu0 0
        %508 = vmatpush1.bf16.msra.mxu0 0
        %509 = vmatprep.subr.bf16.mxu0 0
        %510 = vmatpush1.bf16.msra.mxu0 0
        %511 = vmatprep.subr.bf16.mxu0 0
        %512 = vmatpush1.bf16.msra.mxu0 0
        %513 = vmatprep.subr.bf16.mxu0 0
        %514 = vmatpush1.bf16.msra.mxu0 0
        %515 = vmatprep.subr.bf16.mxu0 0
        %516 = vmatpush1.bf16.msra.mxu0 0
        %517 = vmatprep.mubr.bf16.mxu0 0
        %518 = vmatmul.mubr.bf16.gmra.mrb[0].mxu0 %v483
        %v519 = vpop.f32.mrb[0].mxu0
        %v520 = vadd.f32 0.0, %v519
        %v521 = vpop.f32.mrb[0].mxu0
        %v522 = vpop.f32.mrb[0].mxu0
        %v523 = vadd.f32 0.0, %v522
        %v524 = vpop.f32.mrb[0].mxu0
        %525 = vdwg.mxu0
        %v526 = vmax.f32 %v472, %v520
        %v527 = vmax.f32 %v473, %v523
        %v528 = vld [vmem:[%s2] sm:$0x1]
        %v530 = vlaneseq
        %v531 = vshrl.u32 %v530, 7
        %v532 = vsub.s32 0, %v531
        %v533 = vrot.slane %v528, %v532
        %v535 = vadd.f32 %v526, %v533
        %v536 = vadd.f32 %v527, %v533
        %v537 = vmax.f32 %v535, 0.0
        %v538 = vmax.f32 %v536, 0.0
        %v539 = vpack.c.bf16 %v538, %v537
        %v541 = vunpack.c.l.b16 %v539
        %v542 = vunpack.c.h.b16 %v539
        %v543 = vpack.c.b16 %v541, %v541
        %v544 = vpack.c.b16 %v542, %v542
        %547 = vst [vmem:[%s241] sm:$0xf] %v543
        %548 = vst [vmem:[%s241 + $0x4] sm:$0xf] %v544
        %s549 = smul.u32 2, %s14
        %p550 = scmp.lt.s32.totalorder %s549, 3
        %s551 = scalar_select %p550, %s549, 3
        %s552 = smul.addr %s551, 4
        %s553 = scalar_lea.vmem %s3, %s552
        // Predicated region
        $region74: #{forward.4} parent=68 // pred_check
          %p554 = pneg %p100
        $region75: #{forward.4} parent=68 // pred_check_branch
          %556 = sbr.rel (%p554) target = $region77
        $region76: #{forward.4} parent=68 // pred_region
          %s557 = smul.u32 2, %s14
        $region77: #{forward.4} parent=68 // pred_fallthru
          _
      $region69: #{forward.4} parent=5 // pred_fallthru
        _
      %p558 = scmp.le.s32.totalorder 2, %s9
      // Predicated region
      $region78: #{forward.4} parent=5 // pred_check
        %p559 = pneg %p558
      $region79: #{forward.4} parent=5 // pred_check_branch
        %561 = sbr.rel (%p559) target = $region81
      $region80: #{forward.4} parent=5 // pred_region
        %s562 = ssub.s32 %s9, 2
        // Predicated region
        $region82: #{forward.4} parent=80 // pred_check
          %p563 = pneg %p106
        $region83: #{forward.4} parent=80 // pred_check_branch
          %565 = sbr.rel (%p563) target = $region85
        $region84: #{forward.4} parent=80 // pred_region
          %s566 = smul.u32 2, %s15
          %p567 = scmp.lt.s32.totalorder %s566, 3
          %s568 = scalar_select %p567, %s566, 3
          %s569 = smul.addr %s568, 4
          %s570 = scalar_lea.vmem %s3, %s569
        $region85: #{forward.4} parent=80 // pred_fallthru
          _
      $region81: #{forward.4} parent=5 // pred_fallthru
        _
    $region6: #{forward.4} parent=1 // loop_footer
      %s13 = sadd.s32 1, %s9
    $region7: #{forward.4} parent=1 // loop_footer_branch
      %8 = sbr.rel target = $region3
    $region8: #{forward.4} parent=1 // loop_exit
      _

// kernel: forward.5
$region0: #{forward.5}
  #allocation0 [shape = 'u32[]', space=smem, size = 0x4, offset = 0x4, fixed_abs, tag = 'smem constant byte address 0x4 - core index']
  #allocation1 [shape = 'u32[144,128]{1,0:T(1,128)}', space=vmem, size = 0x12000, scoped, tag = 'internal scratch']
  %s0 = inlined_call_operand.vmem [shape: bf16[16,160], index: 0, kind: input, shape index: {}]
  %s1 = inlined_call_operand.vmem [shape: bf16[160,128], index: 1, kind: input, shape index: {}]
  %s2 = inlined_call_operand.vmem [shape: f32[1,128], index: 2, kind: input, shape index: {}]
  %s3 = inlined_call_operand.vmem [shape: bf16[128,128], index: 3, kind: input, shape index: {}]
  %s4 = inlined_call_operand.vmem [shape: f32[1,128], index: 4, kind: input, shape index: {}]
  %s5 = inlined_call_operand.vmem [shape: f32[16,128], index: 5, kind: output, shape index: {}]
  %s6 = sld [smem:[#allocation0]]
  $region30: #{forward.5} parent=0
    _
  %s8 = ssub.s32 1, %s6
  %s9 = scalar_select 0, %s8, %s6
  // Predicated region
  $region2: #{forward.5} parent=0 // pred_check
    _
  $region3: #{forward.5} parent=0 // pred_check_branch
    %11 = sbr.rel (0) target = $region5
  $region4: #{forward.5} parent=0 // pred_region
    _
  $region5: #{forward.5} parent=0 // pred_fallthru
    _
  // Predicated region
  $region6: #{forward.5} parent=0 // pred_check
    _
  $region7: #{forward.5} parent=0 // pred_check_branch
    %13 = sbr.rel (0) target = $region9
  $region8: #{forward.5} parent=0 // pred_region
    _
  $region9: #{forward.5} parent=0 // pred_fallthru
    _
  // Predicated region
  $region10: #{forward.5} parent=0 // pred_check
    _
  $region11: #{forward.5} parent=0 // pred_check_branch
    %15 = sbr.rel (0) target = $region13
  $region12: #{forward.5} parent=0 // pred_region
    _
  $region13: #{forward.5} parent=0 // pred_fallthru
    _
  // Predicated region
  $region14: #{forward.5} parent=0 // pred_check
    _
  $region15: #{forward.5} parent=0 // pred_check_branch
    %17 = sbr.rel (0) target = $region17
  $region16: #{forward.5} parent=0 // pred_region
    _
  $region17: #{forward.5} parent=0 // pred_fallthru
    _
  // Predicated region
  $region18: #{forward.5} parent=0 // pred_check
    _
  $region19: #{forward.5} parent=0 // pred_check_branch
    %19 = sbr.rel (0) target = $region21
  $region20: #{forward.5} parent=0 // pred_region
    _
  $region21: #{forward.5} parent=0 // pred_fallthru
    _
  %v21 = vld [vmem:[%s0] sm:$0xff]
  %v22 = vld [vmem:[%s0 + $0x8] sm:$0xff]
  %v23 = vld [vmem:[%s1] sm:$0xf]
  %v24 = vld [vmem:[%s1 + $0x4] sm:$0xf]
  %v25 = vld [vmem:[%s1 + $0x8] sm:$0xf]
  %v26 = vld [vmem:[%s1 + $0xc] sm:$0xf]
  %v27 = vld [vmem:[%s1 + $0x10] sm:$0xf]
  %v28 = vld [vmem:[%s1 + $0x14] sm:$0xf]
  %v29 = vld [vmem:[%s1 + $0x18] sm:$0xf]
  %v30 = vld [vmem:[%s1 + $0x1c] sm:$0xf]
  %v31 = vld [vmem:[%s1 + $0x20] sm:$0xf]
  %v32 = vld [vmem:[%s1 + $0x24] sm:$0xf]
  %v33 = vld [vmem:[%s1 + $0x28] sm:$0xf]
  %v34 = vld [vmem:[%s1 + $0x2c] sm:$0xf]
  %v35 = vld [vmem:[%s1 + $0x30] sm:$0xf]
  %v36 = vld [vmem:[%s1 + $0x34] sm:$0xf]
  %v37 = vld [vmem:[%s1 + $0x38] sm:$0xf]
  %v38 = vld [vmem:[%s1 + $0x3c] sm:$0xf]
  %v39 = vld [vmem:[%s1 + $0x40] sm:$0xf]
  %v40 = vld [vmem:[%s1 + $0x44] sm:$0xf]
  %v41 = vld [vmem:[%s1 + $0x48] sm:$0xf]
  %v42 = vld [vmem:[%s1 + $0x4c] sm:$0xf]
  %v43 = vld [vmem:[%s2] sm:$0x1]
  %v45 = vlaneseq
  %v46 = vshrl.u32 %v45, 7
  %v47 = vsub.s32 0, %v46
  %v48 = vrot.slane %v43, %v47
  %v52 = vunpack.c.l.b16 %v21
  %v53 = vunpack.c.h.b16 %v21
  %v54 = vunpack.c.l.b16 %v22
  %v55 = vunpack.c.h.b16 %v22
  %v56 = vpack.c.b16 %v54, %v52
  %v57 = vpack.c.b16 %v55, %v53
  %v79 = vunpack.c.l.b16 %v23
  %v80 = vunpack.c.l.b16 %v24
  %v81 = vunpack.c.l.b16 %v25
  %v82 = vunpack.c.l.b16 %v26
  %v83 = vunpack.c.l.b16 %v27
  %v84 = vunpack.c.l.b16 %v28
  %v85 = vunpack.c.l.b16 %v29
  %v86 = vunpack.c.l.b16 %v30
  %v87 = vunpack.c.l.b16 %v31
  %v88 = vunpack.c.l.b16 %v32
  %v89 = vunpack.c.l.b16 %v33
  %v90 = vunpack.c.l.b16 %v34
  %v91 = vunpack.c.l.b16 %v35
  %v92 = vunpack.c.l.b16 %v36
  %v93 = vunpack.c.l.b16 %v37
  %v94 = vunpack.c.l.b16 %v38
  %v95 = vunpack.c.l.b16 %v39
  %v96 = vunpack.c.l.b16 %v40
  %v97 = vunpack.c.l.b16 %v41
  %v98 = vunpack.c.l.b16 %v42
  %v99 = vpack.c.b16 %v80, %v79
  %v100 = vpack.c.b16 %v82, %v81
  %v101 = vpack.c.b16 %v84, %v83
  %v102 = vpack.c.b16 %v86, %v85
  %v103 = vpack.c.b16 %v88, %v87
  %v104 = vpack.c.b16 %v90, %v89
  %v105 = vpack.c.b16 %v92, %v91
  %v106 = vpack.c.b16 %v94, %v93
  %v107 = vpack.c.b16 %v96, %v95
  %v108 = vpack.c.b16 %v98, %v97
  %vm119 = vcmask 261120
  %v121 = vsel %vm119, %v57, 0
  %123 = vmatprep.subr.bf16.mxu0 0
  %124 = vmatpush1.bf16.msra.mxu0 %v99
  %125 = vmatprep.subr.bf16.mxu0 0
  %126 = vmatpush1.bf16.msra.mxu0 %v100
  %127 = vmatprep.subr.bf16.mxu0 0
  %128 = vmatpush1.bf16.msra.mxu0 %v101
  %129 = vmatprep.subr.bf16.mxu0 0
  %130 = vmatpush1.bf16.msra.mxu0 %v102
  %131 = vmatprep.subr.bf16.mxu0 0
  %132 = vmatpush1.bf16.msra.mxu0 %v103
  %133 = vmatprep.subr.bf16.mxu0 0
  %134 = vmatpush1.bf16.msra.mxu0 %v104
  %135 = vmatprep.subr.bf16.mxu0 0
  %136 = vmatpush1.bf16.msra.mxu0 %v105
  %137 = vmatprep.subr.bf16.mxu0 0
  %138 = vmatpush1.bf16.msra.mxu0 %v106
  %139 = vmatprep.subr.bf16.mxu0 0
  %140 = vmatpush1.bf16.msra.mxu0 %v107
  %141 = vmatprep.subr.bf16.mxu0 0
  %142 = vmatpush1.bf16.msra.mxu0 %v108
  %143 = vmatprep.subr.bf16.mxu0 0
  %144 = vmatpush1.bf16.msra.mxu0 0
  %145 = vmatprep.subr.bf16.mxu0 0
  %146 = vmatpush1.bf16.msra.mxu0 0
  %147 = vmatprep.subr.bf16.mxu0 0
  %148 = vmatpush1.bf16.msra.mxu0 0
  %149 = vmatprep.subr.bf16.mxu0 0
  %150 = vmatpush1.bf16.msra.mxu0 0
  %151 = vmatprep.subr.bf16.mxu0 0
  %152 = vmatpush1.bf16.msra.mxu0 0
  %153 = vmatprep.subr.bf16.mxu0 0
  %154 = vmatpush1.bf16.msra.mxu0 0
  %155 = vmatprep.mubr.bf16.mxu0 %v121
  %156 = vmatmul.mubr.bf16.gmra.mrb[0].mxu0 %v56
  %v157 = vpop.f32.mrb[0].mxu0
  %v158 = vadd.f32 %v48, %v157
  %v159 = vpop.f32.mrb[0].mxu0
  %v160 = vpop.f32.mrb[0].mxu0
  %v161 = vadd.f32 %v48, %v160
  %v162 = vpop.f32.mrb[0].mxu0
  %163 = vdwg.mxu0
  %v164 = vmax.f32 %v158, 0.0
  %v165 = vmax.f32 %v161, 0.0
  %v166 = vpack.c.bf16 %v165, %v164
  %v167 = vld [vmem:[%s3] sm:$0xf]
  %v168 = vld [vmem:[%s3 + $0x4] sm:$0xf]
  %v169 = vld [vmem:[%s3 + $0x8] sm:$0xf]
  %v170 = vld [vmem:[%s3 + $0xc] sm:$0xf]
  %v171 = vld [vmem:[%s3 + $0x10] sm:$0xf]
  %v172 = vld [vmem:[%s3 + $0x14] sm:$0xf]
  %v173 = vld [vmem:[%s3 + $0x18] sm:$0xf]
  %v174 = vld [vmem:[%s3 + $0x1c] sm:$0xf]
  %v175 = vld [vmem:[%s3 + $0x20] sm:$0xf]
  %v176 = vld [vmem:[%s3 + $0x24] sm:$0xf]
  %v177 = vld [vmem:[%s3 + $0x28] sm:$0xf]
  %v178 = vld [vmem:[%s3 + $0x2c] sm:$0xf]
  %v179 = vld [vmem:[%s3 + $0x30] sm:$0xf]
  %v180 = vld [vmem:[%s3 + $0x34] sm:$0xf]
  %v181 = vld [vmem:[%s3 + $0x38] sm:$0xf]
  %v182 = vld [vmem:[%s3 + $0x3c] sm:$0xf]
  %v183 = vld [vmem:[%s4] sm:$0x1]
  %v185 = vlaneseq
  %v186 = vshrl.u32 %v185, 7
  %v187 = vsub.s32 0, %v186
  %v188 = vrot.slane %v183, %v187
  %v206 = vunpack.c.l.b16 %v167
  %v207 = vunpack.c.l.b16 %v168
  %v208 = vunpack.c.l.b16 %v169
  %v209 = vunpack.c.l.b16 %v170
  %v210 = vunpack.c.l.b16 %v171
  %v211 = vunpack.c.l.b16 %v172
  %v212 = vunpack.c.l.b16 %v173
  %v213 = vunpack.c.l.b16 %v174
  %v214 = vunpack.c.l.b16 %v175
  %v215 = vunpack.c.l.b16 %v176
  %v216 = vunpack.c.l.b16 %v177
  %v217 = vunpack.c.l.b16 %v178
  %v218 = vunpack.c.l.b16 %v179
  %v219 = vunpack.c.l.b16 %v180
  %v220 = vunpack.c.l.b16 %v181
  %v221 = vunpack.c.l.b16 %v182
  %v222 = vpack.c.b16 %v207, %v206
  %v223 = vpack.c.b16 %v209, %v208
  %v224 = vpack.c.b16 %v211, %v210
  %v225 = vpack.c.b16 %v213, %v212
  %v226 = vpack.c.b16 %v215, %v214
  %v227 = vpack.c.b16 %v217, %v216
  %v228 = vpack.c.b16 %v219, %v218
  %v229 = vpack.c.b16 %v221, %v220
  %238 = vmatprep.subr.bf16.mxu0 0
  %239 = vmatpush1.bf16.msra.mxu0 %v222
  %240 = vmatprep.subr.bf16.mxu0 0
  %241 = vmatpush1.bf16.msra.mxu0 %v223
  %242 = vmatprep.subr.bf16.mxu0 0
  %243 = vmatpush1.bf16.msra.mxu0 %v224
  %244 = vmatprep.subr.bf16.mxu0 0
  %245 = vmatpush1.bf16.msra.mxu0 %v225
  %246 = vmatprep.subr.bf16.mxu0 0
  %247 = vmatpush1.bf16.msra.mxu0 %v226
  %248 = vmatprep.subr.bf16.mxu0 0
  %249 = vmatpush1.bf16.msra.mxu0 %v227
  %250 = vmatprep.subr.bf16.mxu0 0
  %251 = vmatpush1.bf16.msra.mxu0 %v228
  %252 = vmatprep.subr.bf16.mxu0 0
  %253 = vmatpush1.bf16.msra.mxu0 %v229
  %254 = vmatprep.subr.bf16.mxu0 0
  %255 = vmatpush1.bf16.msra.mxu0 0
  %256 = vmatprep.subr.bf16.mxu0 0
  %257 = vmatpush1.bf16.msra.mxu0 0
  %258 = vmatprep.subr.bf16.mxu0 0
  %259 = vmatpush1.bf16.msra.mxu0 0
  %260 = vmatprep.subr.bf16.mxu0 0
  %261 = vmatpush1.bf16.msra.mxu0 0
  %262 = vmatprep.subr.bf16.mxu0 0
  %263 = vmatpush1.bf16.msra.mxu0 0
  %264 = vmatprep.subr.bf16.mxu0 0
  %265 = vmatpush1.bf16.msra.mxu0 0
  %266 = vmatprep.subr.bf16.mxu0 0
  %267 = vmatpush1.bf16.msra.mxu0 0
  %268 = vmatprep.subr.bf16.mxu0 0
  %269 = vmatpush1.bf16.msra.mxu0 0
  %270 = vmatprep.mubr.bf16.mxu0 0
  %271 = vmatmul.mubr.bf16.gmra.mrb[0].mxu0 %v166
  %v272 = vpop.f32.mrb[0].mxu0
  %v273 = vadd.f32 %v188, %v272
  %v274 = vpop.f32.mrb[0].mxu0
  %v275 = vpop.f32.mrb[0].mxu0
  %v276 = vadd.f32 %v188, %v275
  %v277 = vpop.f32.mrb[0].mxu0
  %278 = vdwg.mxu0
  %v279 = vlaneseq
  %v280 = vand.u32 %v279, 127
  %vm281 = vcmp.lt.s32.totalorder %v280, 10
  %v282 = vsel %vm281, %v273, -1e+30
  %v283 = vsel %vm281, %v276, -1e+30
  %284 = vmax.xlane.f32.xlu0 %v282
  %v285 = vpop.xlane.xlu0 %284
  %286 = vmax.xlane.f32.xlu0 %v283
  %v287 = vpop.xlane.xlu0 %286
  %v288 = vsub.f32 %v282, %v285
  %v289 = vsub.f32 %v283, %v287
  %v290 = vmul.f32 %v288, 1.442695
  %v291 = vpow.pop %v290
  %v292 = vmul.f32 %v289, 1.442695
  %v293 = vpow.pop %v292
  %294 = vadd.xlane.f32.xlu0 %v291
  %v295 = vpop.xlane.xlu0 %294
  %296 = vadd.xlane.f32.xlu0 %v293
  %v297 = vpop.xlane.xlu0 %296
  %v298 = vlog2.pop %v295
  %v299 = vmul.f32 %v298, 0.6931472
  %v300 = vlog2.pop %v297
  %v301 = vmul.f32 %v300, 0.6931472
  %v302 = vadd.f32 %v285, %v299
  %v303 = vadd.f32 %v287, %v301
  %v304 = vsub.f32 %v273, %v302
  %v305 = vsub.f32 %v276, %v303
  %306 = vst [vmem:[%s5] sm:$0xff] %v304
  %307 = vst [vmem:[%s5 + $0x8] sm:$0xff] %v305
  // Predicated region
  $region22: #{forward.5} parent=0 // pred_check
    _
  $region23: #{forward.5} parent=0 // pred_check_branch
    %309 = sbr.rel (0) target = $region25
  $region24: #{forward.5} parent=0 // pred_region
    _
  $region25: #{forward.5} parent=0 // pred_fallthru
    _
  // Predicated region
  $region26: #{forward.5} parent=0 // pred_check
    _
  $region27: #{forward.5} parent=0 // pred_check_branch
    %311 = sbr.rel (0) target = $region29
  $region28: #{forward.5} parent=0 // pred_region
    _
  $region29: #{forward.5} parent=0 // pred_fallthru
    _

</llo_original>
